<compile_context>
chip_gen: v7x
topology: tpu7x:2x2x1
jax: 0.10.0
libtpu: 0.0.40
codegen_flags: <defaults>
</compile_context>

<pallas_src>
import functools
import math

import jax
import jax.numpy as jnp
import numpy as np
from jax import lax
from jax.experimental import pallas as pl
from jax.experimental.pallas import tpu as pltpu


# -----------------------------------------------------------------------------
# Host-side constant builders (static-shape only; hoisted out of the kernel).
# -----------------------------------------------------------------------------
def _build_shift_selectors(H, W, bt):
    """D[k, q, p] = 1 iff output position p takes source position q for the 3x3
    tap k (k = kh*3 + kw) under zero padding; block-diagonal over the bt batch
    elements packed along the lane axis, so taps never leak across elements."""
    HW = H * W
    N = bt * HW
    p = np.arange(N)
    pi = (p % HW) // W
    pj = p % W
    D = np.zeros((9, N, N), np.float32)
    for k in range(9):
        dh, dw = k // 3 - 1, k % 3 - 1
        qi, qj = pi + dh, pj + dw
        valid = (qi >= 0) & (qi < H) & (qj >= 0) & (qj < W)
        q = (p // HW) * HW + qi * W + qj
        D[k, q[valid], p[valid]] = 1.0
    return D


def _build_segment_mask(HW, bt):
    """seg[e, p] = 1 iff lane position p belongs to batch element e."""
    seg = np.zeros((bt, bt * HW), np.float32)
    for e in range(bt):
        seg[e, e * HW:(e + 1) * HW] = 1.0
    return seg


def _pick_bt(B, HW, max_lanes=256):
    """Largest divisor of B whose lane extent bt*HW is 128-aligned and small
    enough to keep the [9, N, N] shift constant modest; falls back to the whole
    batch (a full-extent block keeps the layout legal regardless)."""
    best = None
    for cand in range(1, B + 1):
        if B % cand == 0 and (cand * HW) % 128 == 0 and cand * HW <= max_lanes:
            best = cand
    return best if best is not None else B


# -----------------------------------------------------------------------------
# In-kernel helper: MYNET.encode() body for one block of bt batch elements.
# x_ref: [C, N] (N = bt*HW, element-major lanes), w9_ref: [9, C] (BN scale
# folded, row k = kh*3 + kw), d_ref: [9, N, N] halo selectors, seg_ref: [bt, N]
# per-element segment mask, shift_ref: (1,) folded BN shift in SMEM.
# Returns pooled features [bt, C] in f32.
# -----------------------------------------------------------------------------
def _pooled_features(x_ref, w9_ref, d_ref, seg_ref, shift_ref, *, HW, use_mask,
                     mask_normalize):
    x = x_ref[...]                                                  # [C, N]
    seg = seg_ref[...]                                              # [bt, N]

    if use_mask:
        # conv_mask channel contraction: ONE lane-dense MXU matmul.
        z = lax.dot_general(w9_ref[...], x, (((1,), (0,)), ((), ())),
                            preferred_element_type=jnp.float32)     # [9, N]
        # 3x3 spatial halo (implicit zero pad) via the hoisted VMEM-resident
        # selection constants: 9 tiny [1,N]x[N,N] MXU ops, zero VALU setup.
        m_row = lax.dot_general(z[0:1, :], d_ref[0], (((1,), (0,)), ((), ())),
                                preferred_element_type=jnp.float32)
        for k in range(1, 9):
            m_row = m_row + lax.dot_general(
                z[k:k + 1, :], d_ref[k], (((1,), (0,)), ((), ())),
                preferred_element_type=jnp.float32)                 # [1, N]
        # folded BN shift (SMEM scalar), then sigmoid (EUP).
        s_row = jax.nn.sigmoid(m_row + shift_ref[0])                # [1, N]
        if mask_normalize:
            num = seg * (s_row + 1e-5)                              # [bt, N]
            denom = jnp.sum(num, axis=1, keepdims=True)             # [bt, 1]
            # mask normalization and the 1/(H*W) pool factor folded together.
            w_blk = num / (denom * float(HW))
        else:
            w_blk = seg * s_row * (1.0 / float(HW))
    else:
        w_blk = seg * (1.0 / float(HW))

    # masked adaptive_avg_pool2d(1): ONE block-diagonal [bt,N] x [C,N]^T matmul.
    pooled = lax.dot_general(w_blk.astype(x.dtype), x,
                             (((1,), (1,)), ((), ())),
                             preferred_element_type=jnp.float32)    # [bt, C]
    return pooled


# -----------------------------------------------------------------------------
# Fused kernels (encode -> optional metric head), bt batch elems per grid step.
# -----------------------------------------------------------------------------
def _encoder_kernel(x_ref, w9_ref, d_ref, seg_ref, shift_ref, out_ref, *,
                    HW, use_mask, mask_normalize):
    pooled = _pooled_features(x_ref, w9_ref, d_ref, seg_ref, shift_ref,
                              HW=HW, use_mask=use_mask,
                              mask_normalize=mask_normalize)
    out_ref[...] = pooled.reshape(out_ref.shape).astype(out_ref.dtype)


def _cos_kernel(x_ref, w9_ref, d_ref, seg_ref, shift_ref, wn_ref, out_ref, *,
                HW, use_mask, mask_normalize, temperature):
    pooled = _pooled_features(x_ref, w9_ref, d_ref, seg_ref, shift_ref,
                              HW=HW, use_mask=use_mask,
                              mask_normalize=mask_normalize)
    # F.linear(F.normalize(x), F.normalize(W)) * temperature
    n2 = jnp.sum(pooled * pooled, axis=1, keepdims=True)            # [bt, 1]
    fn = pooled * lax.rsqrt(jnp.maximum(n2, 1e-24))  # == x / max(||x||, 1e-12)
    logits = lax.dot_general(fn.astype(wn_ref.dtype), wn_ref[...],
                             (((1,), (1,)), ((), ())),
                             preferred_element_type=jnp.float32)    # [bt, Mp]
    out_ref[...] = (temperature * logits).reshape(out_ref.shape).astype(
        out_ref.dtype)


def _euclidean_kernel(x_ref, w9_ref, d_ref, seg_ref, shift_ref, fcw_ref,
                      w2_ref, out_ref, *, HW, use_mask, mask_normalize,
                      temperature):
    pooled = _pooled_features(x_ref, w9_ref, d_ref, seg_ref, shift_ref,
                              HW=HW, use_mask=use_mask,
                              mask_normalize=mask_normalize)
    # -temperature * ||x - w||^2 ; factorized f32 form, clamped against
    # cancellation (PyTorch form is a sum of squares >= 0).
    n2 = jnp.sum(pooled * pooled, axis=1, keepdims=True)            # [bt, 1]
    xw = lax.dot_general(pooled.astype(fcw_ref.dtype), fcw_ref[...],
                         (((1,), (1,)), ((), ())),
                         preferred_element_type=jnp.float32)        # [bt, Mp]
    dist = jnp.maximum(n2 + w2_ref[...] - 2.0 * xw, 0.0)
    out_ref[...] = (-temperature * dist).reshape(out_ref.shape).astype(
        out_ref.dtype)


# -----------------------------------------------------------------------------
# Wrappers (parameter folding / padding stays in plain JAX).
# -----------------------------------------------------------------------------
def _fold_mask_params(params, C, compute_dtype):
    # eval-mode BatchNorm2d(1) folded into the conv weight + an SMEM scalar.
    scale = params['bn_gamma'] / jnp.sqrt(params['bn_var'] + 1e-5)
    shift = params['bn_beta'] - params['bn_mean'] * scale
    # PyTorch conv weight [1, C, 3, 3] -> [9, C] with row index k = kh*3 + kw.
    w9 = jnp.transpose(params['conv_mask_w'][0], (1, 2, 0)).reshape(9, C)
    w9 = (w9 * scale).astype(compute_dtype)
    return w9, jnp.asarray(shift, jnp.float32).reshape(1)


def mynet_forward(feat_nchw, params, *, mode='cos', temperature=16.0,
                  debug3_maskLoss=True, mask_normalize=True,
                  compute_dtype=jnp.bfloat16):
    """MYNET.forward() from the encoder's output feature map onward."""
    B, C, H, W = feat_nchw.shape
    HW = H * W
    bt = _pick_bt(B, HW)
    nblk = B // bt
    N = bt * HW

    # [B,C,H,W] -> [C, B*HW] element-major columns (one fused transpose+cast
    # XLA op); every in-kernel matmul is then lane-dense.  In a real pipeline
    # the encoder would emit this layout/dtype directly.
    x = jnp.transpose(feat_nchw.reshape(B, C, HW), (1, 0, 2))
    x = x.reshape(C, B * HW).astype(compute_dtype)

    w9, shift = _fold_mask_params(params, C, compute_dtype)
    d_sel = jnp.asarray(_build_shift_selectors(H, W, bt))          # [9, N, N]
    seg = jnp.asarray(_build_segment_mask(HW, bt))                 # [bt, N]

    x_spec = pl.BlockSpec((C, N), lambda i: (0, i))
    w9_spec = pl.BlockSpec((9, C), lambda i: (0, 0))
    d_spec = pl.BlockSpec((9, N, N), lambda i: (0, 0, 0))
    seg_spec = pl.BlockSpec((bt, N), lambda i: (0, 0))
    shift_spec = pl.BlockSpec(memory_space=pltpu.MemorySpace.SMEM)
    cparams = pltpu.CompilerParams(dimension_semantics=("parallel",))
    common = dict(HW=HW, use_mask=debug3_maskLoss,
                  mask_normalize=mask_normalize)

    if mode == 'encoder':
        kern = functools.partial(_encoder_kernel, **common)
        feats = pl.pallas_call(
            kern,
            out_shape=jax.ShapeDtypeStruct((nblk, bt, C), jnp.float32),
            grid=(nblk,),
            in_specs=[x_spec, w9_spec, d_spec, seg_spec, shift_spec],
            out_specs=pl.BlockSpec((1, bt, C), lambda i: (i, 0, 0)),
            compiler_params=cparams,
        )(x, w9, d_sel, seg, shift)
        return feats.reshape(B, C)

    fc_w = params['fc_w'].astype(jnp.float32)
    M = fc_w.shape[0]
    M_pad = ((M + 127) // 128) * 128        # lane-dense fc rows / logits

    if 'cos' in mode:
        # weight-only work hoisted out of the kernel; zero-padded rows stay
        # exactly zero after normalization.
        wn = fc_w * lax.rsqrt(
            jnp.maximum(jnp.sum(fc_w * fc_w, axis=1, keepdims=True), 1e-24))
        wn = jnp.pad(wn, ((0, M_pad - M), (0, 0))).astype(compute_dtype)
        kern = functools.partial(_cos_kernel, temperature=float(temperature),
                                 **common)
        logits = pl.pallas_call(
            kern,
            out_shape=jax.ShapeDtypeStruct((nblk, bt, M_pad), jnp.float32),
            grid=(nblk,),
            in_specs=[x_spec, w9_spec, d_spec, seg_spec, shift_spec,
                      pl.BlockSpec((M_pad, C), lambda i: (0, 0))],
            out_specs=pl.BlockSpec((1, bt, M_pad), lambda i: (i, 0, 0)),
            compiler_params=cparams,
        )(x, w9, d_sel, seg, shift, wn)
        return logits.reshape(B, M_pad)[:, :M]

    if 'euclidean' in mode:
        w2 = jnp.pad(jnp.sum(fc_w * fc_w, axis=1),
                     (0, M_pad - M)).reshape(1, M_pad)              # hoisted
        fcw = jnp.pad(fc_w, ((0, M_pad - M), (0, 0))).astype(compute_dtype)
        kern = functools.partial(_euclidean_kernel,
                                 temperature=float(temperature), **common)
        logits = pl.pallas_call(
            kern,
            out_shape=jax.ShapeDtypeStruct((nblk, bt, M_pad), jnp.float32),
            grid=(nblk,),
            in_specs=[x_spec, w9_spec, d_spec, seg_spec, shift_spec,
                      pl.BlockSpec((M_pad, C), lambda i: (0, 0)),
                      pl.BlockSpec((1, M_pad), lambda i: (0, 0))],
            out_specs=pl.BlockSpec((1, bt, M_pad), lambda i: (i, 0, 0)),
            compiler_params=cparams,
        )(x, w9, d_sel, seg, shift, fcw, w2)
        return logits.reshape(B, M_pad)[:, :M]

    raise ValueError(f"unknown mode: {mode}")


def init_params(key, C, num_classes):
    k1, k2 = jax.random.split(key)
    conv_bound = 1.0 / math.sqrt(C * 9.0)      # Conv2d default-ish init
    fc_bound = 1.0 / math.sqrt(float(C))       # Linear(kaiming_uniform a=sqrt(5))
    return {
        'conv_mask_w': jax.random.uniform(k1, (1, C, 3, 3), jnp.float32,
                                          -conv_bound, conv_bound),
        'bn_gamma': jnp.float32(1.2),
        'bn_beta': jnp.float32(0.1),
        'bn_mean': jnp.float32(0.05),
        'bn_var': jnp.float32(0.8),
        'fc_w': jax.random.uniform(k2, (num_classes, C), jnp.float32,
                                   -fc_bound, fc_bound),
    }


# -----------------------------------------------------------------------------
# Plain-JAX reference of the PyTorch forward pass (for the correctness check).
# -----------------------------------------------------------------------------
def ref_forward(feat, params, mode, temperature, *, use_mask=True,
                mask_normalize=True):
    B, C, H, W = feat.shape
    cw = params['conv_mask_w']
    scale = params['bn_gamma'] / jnp.sqrt(params['bn_var'] + 1e-5)
    shift = params['bn_beta'] - params['bn_mean'] * scale
    if use_mask:
        xp = jnp.pad(feat, ((0, 0), (0, 0), (1, 1), (1, 1)))
        m = jnp.zeros((B, H, W), jnp.float32)
        for dh in range(3):
            for dw in range(3):
                m = m + jnp.einsum('bchw,c->bhw',
                                   xp[:, :, dh:dh + H, dw:dw + W],
                                   cw[0, :, dh, dw],
                                   precision=lax.Precision.HIGHEST)
        s = jax.nn.sigmoid(m * scale + shift)[:, None]             # [B,1,H,W]
        if mask_normalize:
            eps = 1e-5
            s = (s + eps) / jnp.sum(s + eps, axis=(-1, -2), keepdims=True)
        xm = feat * s
    else:
        xm = feat
    feats = jnp.mean(xm, axis=(2, 3))                              # [B, C]
    if mode == 'encoder':
        return feats
    fcw = params['fc_w']
    if mode == 'cos':
        fn = feats / jnp.maximum(
            jnp.linalg.norm(feats, axis=1, keepdims=True), 1e-12)
        wn = fcw / jnp.maximum(
            jnp.linalg.norm(fcw, axis=1, keepdims=True), 1e-12)
        return temperature * jnp.einsum('bc,mc->bm', fn, wn,
                                        precision=lax.Precision.HIGHEST)
    if mode == 'euclidean':
        d = jnp.sum((feats[:, None, :] - fcw[None, :, :]) ** 2, axis=-1)
        return -temperature * d
    raise ValueError(mode)


if __name__ == "__main__":
    B, C, H, W = 2, 512, 8, 8          # num_features = 512 per MYNET.__init__
    num_classes = 16
    temperature = 16.0

    key = jax.random.PRNGKey(0)
    k_feat, k_param = jax.random.split(key)
    # Stand-in for resnet18(x): the encoder's NCHW output feature map.
    feat = jax.random.normal(k_feat, (B, C, H, W), jnp.float32)
    params = init_params(k_param, C, num_classes)

    logits_cos = mynet_forward(feat, params, mode='cos',
                               temperature=temperature)
    logits_euc = mynet_forward(feat, params, mode='euclidean',
                               temperature=temperature)
    feats_enc = mynet_forward(feat, params, mode='encoder')
    logits_cos_nn = mynet_forward(feat, params, mode='cos',
                                  temperature=temperature,
                                  mask_normalize=False)
    feats_nomask = mynet_forward(feat, params, mode='encoder',
                                 debug3_maskLoss=False)
    jax.block_until_ready((logits_cos, logits_euc, feats_enc,
                           logits_cos_nn, feats_nomask))

    assert logits_cos.shape == (B, num_classes)
    assert logits_euc.shape == (B, num_classes)
    assert feats_enc.shape == (B, C)

    # correctness vs the plain-JAX f32 reference of the PyTorch forward pass
    # (tolerances sized for bf16 matmul operands with f32 accumulation).
    ref_cos = ref_forward(feat, params, 'cos', temperature)
    ref_euc = ref_forward(feat, params, 'euclidean', temperature)
    ref_enc = ref_forward(feat, params, 'encoder', temperature)
    ref_cos_nn = ref_forward(feat, params, 'cos', temperature,
                             mask_normalize=False)
    ref_nomask = ref_forward(feat, params, 'encoder', temperature,
                             use_mask=False)

    np.testing.assert_allclose(np.asarray(logits_cos), np.asarray(ref_cos),
                               rtol=2e-2, atol=6e-2)
    np.testing.assert_allclose(np.asarray(logits_euc), np.asarray(ref_euc),
                               rtol=2e-2, atol=2e-1)
    np.testing.assert_allclose(np.asarray(feats_enc), np.asarray(ref_enc),
                               rtol=2e-2, atol=5e-3)
    np.testing.assert_allclose(np.asarray(logits_cos_nn),
                               np.asarray(ref_cos_nn), rtol=2e-2, atol=6e-2)
    np.testing.assert_allclose(np.asarray(feats_nomask),
                               np.asarray(ref_nomask), rtol=2e-2, atol=5e-3)

    print("KERNEL_OK")
</pallas_src>

<mosaic_0001>
module attributes {stable_mosaic.version = 11 : i64} {
  func.func @_cos_kernel(%arg0: i32, %arg1: memref<512x128xbf16, #tpu.memory_space<vmem>>, %arg2: memref<9x512xbf16, #tpu.memory_space<vmem>>, %arg3: memref<9x128x128xf32, #tpu.memory_space<vmem>>, %arg4: memref<2x128xf32, #tpu.memory_space<vmem>>, %arg5: memref<1xf32, #tpu.memory_space<smem>>, %arg6: memref<128x512xbf16, #tpu.memory_space<vmem>>, %arg7: memref<1x2x128xf32, #tpu.memory_space<vmem>>) attributes {dimension_semantics = [#tpu.dimension_semantics<parallel>], iteration_bounds = array<i64: 1>, scalar_prefetch = 0 : i64, scratch_operands = 0 : i64, tpu.core_type = #tpu.core_type<tc>, window_params = [{transform_indices = @transform_0, window_bounds = array<i64: 512, 128>}, {pipeline_mode = #tpu.pipeline_mode<synchronous>, transform_indices = @transform_1, window_bounds = array<i64: 9, 512>}, {pipeline_mode = #tpu.pipeline_mode<synchronous>, transform_indices = @transform_2, window_bounds = array<i64: 9, 128, 128>}, {pipeline_mode = #tpu.pipeline_mode<synchronous>, transform_indices = @transform_3, window_bounds = array<i64: 2, 128>}, {transform_indices = @transform_4, window_bounds = array<i64: 1>}, {pipeline_mode = #tpu.pipeline_mode<synchronous>, transform_indices = @transform_5, window_bounds = array<i64: 128, 512>}, {transform_indices = @transform_6, window_bounds = array<i64: 1, 2, 128>}]} {
    %c0 = arith.constant 0 : index
    %c0_0 = arith.constant 0 : index
    %0 = vector.load %arg1[%c0, %c0_0] : memref<512x128xbf16, #tpu.memory_space<vmem>>, vector<512x128xbf16>
    %c0_1 = arith.constant 0 : index
    %c0_2 = arith.constant 0 : index
    %1 = vector.load %arg4[%c0_1, %c0_2] : memref<2x128xf32, #tpu.memory_space<vmem>>, vector<2x128xf32>
    %c0_3 = arith.constant 0 : index
    %c0_4 = arith.constant 0 : index
    %2 = vector.load %arg2[%c0_3, %c0_4] : memref<9x512xbf16, #tpu.memory_space<vmem>>, vector<9x512xbf16>
    %cst = arith.constant dense<0.000000e+00> : vector<9x128xf32>
    %3 = tpu.matmul %2, %0, %cst {dimension_numbers = #tpu.dot_dimension_numbers<[1], [0], [0], [1], [0, 0, 1, 1], [], []>} : vector<9x512xbf16>, vector<512x128xbf16>, vector<9x128xf32> -> vector<9x128xf32>
    %4 = vector.extract_strided_slice %3 {offsets = [0, 0], sizes = [1, 128], strides = [1, 1]} : vector<9x128xf32> to vector<1x128xf32>
    %c0_5 = arith.constant 0 : index
    %c0_6 = arith.constant 0 : index
    %c0_7 = arith.constant 0 : index
    %5 = vector.load %arg3[%c0_5, %c0_6, %c0_7] : memref<9x128x128xf32, #tpu.memory_space<vmem>>, vector<1x128x128xf32>
    %6 = vector.shape_cast %5 : vector<1x128x128xf32> to vector<128x128xf32>
    %cst_8 = arith.constant dense<0.000000e+00> : vector<1x128xf32>
    %7 = tpu.matmul %4, %6, %cst_8 {dimension_numbers = #tpu.dot_dimension_numbers<[1], [0], [0], [1], [0, 0, 1, 1], [], []>} : vector<1x128xf32>, vector<128x128xf32>, vector<1x128xf32> -> vector<1x128xf32>
    %8 = vector.extract_strided_slice %3 {offsets = [1, 0], sizes = [1, 128], strides = [1, 1]} : vector<9x128xf32> to vector<1x128xf32>
    %c1 = arith.constant 1 : index
    %c0_9 = arith.constant 0 : index
    %c0_10 = arith.constant 0 : index
    %9 = vector.load %arg3[%c1, %c0_9, %c0_10] : memref<9x128x128xf32, #tpu.memory_space<vmem>>, vector<1x128x128xf32>
    %10 = vector.shape_cast %9 : vector<1x128x128xf32> to vector<128x128xf32>
    %cst_11 = arith.constant dense<0.000000e+00> : vector<1x128xf32>
    %11 = tpu.matmul %8, %10, %cst_11 {dimension_numbers = #tpu.dot_dimension_numbers<[1], [0], [0], [1], [0, 0, 1, 1], [], []>} : vector<1x128xf32>, vector<128x128xf32>, vector<1x128xf32> -> vector<1x128xf32>
    %12 = arith.addf %7, %11 : vector<1x128xf32>
    %13 = vector.extract_strided_slice %3 {offsets = [2, 0], sizes = [1, 128], strides = [1, 1]} : vector<9x128xf32> to vector<1x128xf32>
    %c2 = arith.constant 2 : index
    %c0_12 = arith.constant 0 : index
    %c0_13 = arith.constant 0 : index
    %14 = vector.load %arg3[%c2, %c0_12, %c0_13] : memref<9x128x128xf32, #tpu.memory_space<vmem>>, vector<1x128x128xf32>
    %15 = vector.shape_cast %14 : vector<1x128x128xf32> to vector<128x128xf32>
    %cst_14 = arith.constant dense<0.000000e+00> : vector<1x128xf32>
    %16 = tpu.matmul %13, %15, %cst_14 {dimension_numbers = #tpu.dot_dimension_numbers<[1], [0], [0], [1], [0, 0, 1, 1], [], []>} : vector<1x128xf32>, vector<128x128xf32>, vector<1x128xf32> -> vector<1x128xf32>
    %17 = arith.addf %12, %16 : vector<1x128xf32>
    %18 = vector.extract_strided_slice %3 {offsets = [3, 0], sizes = [1, 128], strides = [1, 1]} : vector<9x128xf32> to vector<1x128xf32>
    %c3 = arith.constant 3 : index
    %c0_15 = arith.constant 0 : index
    %c0_16 = arith.constant 0 : index
    %19 = vector.load %arg3[%c3, %c0_15, %c0_16] : memref<9x128x128xf32, #tpu.memory_space<vmem>>, vector<1x128x128xf32>
    %20 = vector.shape_cast %19 : vector<1x128x128xf32> to vector<128x128xf32>
    %cst_17 = arith.constant dense<0.000000e+00> : vector<1x128xf32>
    %21 = tpu.matmul %18, %20, %cst_17 {dimension_numbers = #tpu.dot_dimension_numbers<[1], [0], [0], [1], [0, 0, 1, 1], [], []>} : vector<1x128xf32>, vector<128x128xf32>, vector<1x128xf32> -> vector<1x128xf32>
    %22 = arith.addf %17, %21 : vector<1x128xf32>
    %23 = vector.extract_strided_slice %3 {offsets = [4, 0], sizes = [1, 128], strides = [1, 1]} : vector<9x128xf32> to vector<1x128xf32>
    %c4 = arith.constant 4 : index
    %c0_18 = arith.constant 0 : index
    %c0_19 = arith.constant 0 : index
    %24 = vector.load %arg3[%c4, %c0_18, %c0_19] : memref<9x128x128xf32, #tpu.memory_space<vmem>>, vector<1x128x128xf32>
    %25 = vector.shape_cast %24 : vector<1x128x128xf32> to vector<128x128xf32>
    %cst_20 = arith.constant dense<0.000000e+00> : vector<1x128xf32>
    %26 = tpu.matmul %23, %25, %cst_20 {dimension_numbers = #tpu.dot_dimension_numbers<[1], [0], [0], [1], [0, 0, 1, 1], [], []>} : vector<1x128xf32>, vector<128x128xf32>, vector<1x128xf32> -> vector<1x128xf32>
    %27 = arith.addf %22, %26 : vector<1x128xf32>
    %28 = vector.extract_strided_slice %3 {offsets = [5, 0], sizes = [1, 128], strides = [1, 1]} : vector<9x128xf32> to vector<1x128xf32>
    %c5 = arith.constant 5 : index
    %c0_21 = arith.constant 0 : index
    %c0_22 = arith.constant 0 : index
    %29 = vector.load %arg3[%c5, %c0_21, %c0_22] : memref<9x128x128xf32, #tpu.memory_space<vmem>>, vector<1x128x128xf32>
    %30 = vector.shape_cast %29 : vector<1x128x128xf32> to vector<128x128xf32>
    %cst_23 = arith.constant dense<0.000000e+00> : vector<1x128xf32>
    %31 = tpu.matmul %28, %30, %cst_23 {dimension_numbers = #tpu.dot_dimension_numbers<[1], [0], [0], [1], [0, 0, 1, 1], [], []>} : vector<1x128xf32>, vector<128x128xf32>, vector<1x128xf32> -> vector<1x128xf32>
    %32 = arith.addf %27, %31 : vector<1x128xf32>
    %33 = vector.extract_strided_slice %3 {offsets = [6, 0], sizes = [1, 128], strides = [1, 1]} : vector<9x128xf32> to vector<1x128xf32>
    %c6 = arith.constant 6 : index
    %c0_24 = arith.constant 0 : index
    %c0_25 = arith.constant 0 : index
    %34 = vector.load %arg3[%c6, %c0_24, %c0_25] : memref<9x128x128xf32, #tpu.memory_space<vmem>>, vector<1x128x128xf32>
    %35 = vector.shape_cast %34 : vector<1x128x128xf32> to vector<128x128xf32>
    %cst_26 = arith.constant dense<0.000000e+00> : vector<1x128xf32>
    %36 = tpu.matmul %33, %35, %cst_26 {dimension_numbers = #tpu.dot_dimension_numbers<[1], [0], [0], [1], [0, 0, 1, 1], [], []>} : vector<1x128xf32>, vector<128x128xf32>, vector<1x128xf32> -> vector<1x128xf32>
    %37 = arith.addf %32, %36 : vector<1x128xf32>
    %38 = vector.extract_strided_slice %3 {offsets = [7, 0], sizes = [1, 128], strides = [1, 1]} : vector<9x128xf32> to vector<1x128xf32>
    %c7 = arith.constant 7 : index
    %c0_27 = arith.constant 0 : index
    %c0_28 = arith.constant 0 : index
    %39 = vector.load %arg3[%c7, %c0_27, %c0_28] : memref<9x128x128xf32, #tpu.memory_space<vmem>>, vector<1x128x128xf32>
    %40 = vector.shape_cast %39 : vector<1x128x128xf32> to vector<128x128xf32>
    %cst_29 = arith.constant dense<0.000000e+00> : vector<1x128xf32>
    %41 = tpu.matmul %38, %40, %cst_29 {dimension_numbers = #tpu.dot_dimension_numbers<[1], [0], [0], [1], [0, 0, 1, 1], [], []>} : vector<1x128xf32>, vector<128x128xf32>, vector<1x128xf32> -> vector<1x128xf32>
    %42 = arith.addf %37, %41 : vector<1x128xf32>
    %43 = vector.extract_strided_slice %3 {offsets = [8, 0], sizes = [1, 128], strides = [1, 1]} : vector<9x128xf32> to vector<1x128xf32>
    %c8 = arith.constant 8 : index
    %c0_30 = arith.constant 0 : index
    %c0_31 = arith.constant 0 : index
    %44 = vector.load %arg3[%c8, %c0_30, %c0_31] : memref<9x128x128xf32, #tpu.memory_space<vmem>>, vector<1x128x128xf32>
    %45 = vector.shape_cast %44 : vector<1x128x128xf32> to vector<128x128xf32>
    %cst_32 = arith.constant dense<0.000000e+00> : vector<1x128xf32>
    %46 = tpu.matmul %43, %45, %cst_32 {dimension_numbers = #tpu.dot_dimension_numbers<[1], [0], [0], [1], [0, 0, 1, 1], [], []>} : vector<1x128xf32>, vector<128x128xf32>, vector<1x128xf32> -> vector<1x128xf32>
    %47 = arith.addf %42, %46 : vector<1x128xf32>
    %c0_33 = arith.constant 0 : index
    %48 = memref.load %arg5[%c0_33] : memref<1xf32, #tpu.memory_space<smem>>
    %49 = vector.broadcast %48 : f32 to vector<1x128xf32>
    %50 = arith.addf %47, %49 : vector<1x128xf32>
    %51 = arith.negf %50 : vector<1x128xf32>
    %52 = math.exp %51 : vector<1x128xf32>
    %cst_34 = arith.constant 1.000000e+00 : f32
    %53 = vector.broadcast %cst_34 : f32 to vector<1x128xf32>
    %54 = arith.addf %53, %52 : vector<1x128xf32>
    %55 = arith.divf %53, %54 : vector<1x128xf32>
    %cst_35 = arith.constant 9.99999974E-6 : f32
    %56 = vector.broadcast %cst_35 : f32 to vector<1x128xf32>
    %57 = arith.addf %55, %56 : vector<1x128xf32>
    %58 = vector.broadcast %57 : vector<1x128xf32> to vector<2x128xf32>
    %59 = arith.mulf %1, %58 : vector<2x128xf32>
    %cst_36 = arith.constant dense<0.000000e+00> : vector<2xf32>
    %60 = vector.multi_reduction <add>, %59, %cst_36 [1] : vector<2x128xf32> to vector<2xf32>
    %61 = vector.shape_cast %60 : vector<2xf32> to vector<2x1xf32>
    %cst_37 = arith.constant 6.400000e+01 : f32
    %62 = vector.broadcast %cst_37 : f32 to vector<2x1xf32>
    %63 = arith.mulf %61, %62 : vector<2x1xf32>
    %64 = vector.broadcast %63 : vector<2x1xf32> to vector<2x128xf32>
    %65 = arith.divf %59, %64 : vector<2x128xf32>
    %66 = arith.truncf %65 : vector<2x128xf32> to vector<2x128xbf16>
    %cst_38 = arith.constant dense<0.000000e+00> : vector<2x512xf32>
    %67 = tpu.matmul %66, %0, %cst_38 {dimension_numbers = #tpu.dot_dimension_numbers<[1], [1], [0], [0], [0, 0, 1, 0], [], []>} : vector<2x128xbf16>, vector<512x128xbf16>, vector<2x512xf32> -> vector<2x512xf32>
    %68 = arith.mulf %67, %67 : vector<2x512xf32>
    %cst_39 = arith.constant dense<0.000000e+00> : vector<2xf32>
    %69 = vector.multi_reduction <add>, %68, %cst_39 [1] : vector<2x512xf32> to vector<2xf32>
    %70 = vector.shape_cast %69 : vector<2xf32> to vector<2x1xf32>
    %cst_40 = arith.constant 1.000000e-24 : f32
    %71 = vector.broadcast %cst_40 : f32 to vector<2x1xf32>
    %72 = arith.maximumf %70, %71 : vector<2x1xf32>
    %73 = math.rsqrt %72 : vector<2x1xf32>
    %74 = vector.broadcast %73 : vector<2x1xf32> to vector<2x512xf32>
    %75 = arith.mulf %67, %74 : vector<2x512xf32>
    %76 = arith.truncf %75 : vector<2x512xf32> to vector<2x512xbf16>
    %c0_41 = arith.constant 0 : index
    %c0_42 = arith.constant 0 : index
    %77 = vector.load %arg6[%c0_41, %c0_42] : memref<128x512xbf16, #tpu.memory_space<vmem>>, vector<128x512xbf16>
    %cst_43 = arith.constant dense<0.000000e+00> : vector<2x128xf32>
    %78 = tpu.matmul %76, %77, %cst_43 {dimension_numbers = #tpu.dot_dimension_numbers<[1], [1], [0], [0], [0, 0, 1, 0], [], []>} : vector<2x512xbf16>, vector<128x512xbf16>, vector<2x128xf32> -> vector<2x128xf32>
    %cst_44 = arith.constant 1.600000e+01 : f32
    %79 = vector.broadcast %cst_44 : f32 to vector<2x128xf32>
    %80 = arith.mulf %79, %78 : vector<2x128xf32>
    %81 = vector.shape_cast %80 : vector<2x128xf32> to vector<1x2x128xf32>
    %c0_45 = arith.constant 0 : index
    %c0_46 = arith.constant 0 : index
    %c0_47 = arith.constant 0 : index
    %82 = vector.load %arg7[%c0_45, %c0_46, %c0_47] : memref<1x2x128xf32, #tpu.memory_space<vmem>>, vector<1x2x128xf32>
    tpu.vector_store %arg7[%c0_45, %c0_46, %c0_47], %81 {strides = array<i32>} : memref<1x2x128xf32, #tpu.memory_space<vmem>>, vector<1x2x128xf32>,
    return
  }
  func.func @transform_0(%arg0: i32) -> (i32, i32) {
    %c0_i32 = arith.constant 0 : i32
    %c0_i32_0 = arith.constant 0 : i32
    return %c0_i32, %arg0 : i32, i32
  }
  func.func @transform_1(%arg0: i32) -> (i32, i32) {
    %c0_i32 = arith.constant 0 : i32
    %c0_i32_0 = arith.constant 0 : i32
    %c0_i32_1 = arith.constant 0 : i32
    return %c0_i32, %c0_i32_0 : i32, i32
  }
  func.func @transform_2(%arg0: i32) -> (i32, i32, i32) {
    %c0_i32 = arith.constant 0 : i32
    %c0_i32_0 = arith.constant 0 : i32
    %c0_i32_1 = arith.constant 0 : i32
    %c0_i32_2 = arith.constant 0 : i32
    return %c0_i32, %c0_i32_0, %c0_i32_1 : i32, i32, i32
  }
  func.func @transform_3(%arg0: i32) -> (i32, i32) {
    %c0_i32 = arith.constant 0 : i32
    %c0_i32_0 = arith.constant 0 : i32
    %c0_i32_1 = arith.constant 0 : i32
    return %c0_i32, %c0_i32_0 : i32, i32
  }
  func.func @transform_4(%arg0: i32) -> i32 {
    %c0_i32 = arith.constant 0 : i32
    %c0_i32_0 = arith.constant 0 : i32
    return %c0_i32 : i32
  }
  func.func @transform_5(%arg0: i32) -> (i32, i32) {
    %c0_i32 = arith.constant 0 : i32
    %c0_i32_0 = arith.constant 0 : i32
    %c0_i32_1 = arith.constant 0 : i32
    return %c0_i32, %c0_i32_0 : i32, i32
  }
  func.func @transform_6(%arg0: i32) -> (i32, i32, i32) {
    %c0_i32 = arith.constant 0 : i32
    %c0_i32_0 = arith.constant 0 : i32
    %c0_i32_1 = arith.constant 0 : i32
    return %arg0, %c0_i32, %c0_i32_0 : i32, i32, i32
  }
}

</mosaic_0001>

<llo_original>
// kernel: tpu_custom_call.1
$region0: #{tpu_custom_call.1}
  #allocation0 [shape = 'u32[]', space=smem, size = 0x4, offset = 0x4, fixed_abs, tag = 'smem constant byte address 0x4 - core index']
  #allocation1 [shape = 'u32[144,128]{1,0:T(1,128)}', space=vmem, size = 0x12000, scoped, tag = 'internal scratch']
  #allocation2 [shape = 'f32[1]{0:T(128)S(6)}', space=smem, size = 0x200, scoped, tag = 'scoped memory for tpu_custom_call.1']
  %s0 = inlined_call_operand.hbm [shape: bf16[512,128], index: 0, kind: input, shape index: {}]
  %s1 = inlined_call_operand.hbm [shape: bf16[9,512], index: 1, kind: input, shape index: {}]
  %s2 = inlined_call_operand.hbm [shape: f32[9,128,128], index: 2, kind: input, shape index: {}]
  %s3 = inlined_call_operand.vmem [shape: f32[2,128], index: 3, kind: input, shape index: {}]
  %s4 = inlined_call_operand.<no memory space> [shape: f32[1], index: 4, kind: input, shape index: {}]
  %s5 = inlined_call_operand.hbm [shape: bf16[128,512], index: 5, kind: input, shape index: {}]
  %s6 = inlined_call_operand.hbm [shape: f32[1,2,128], index: 6, kind: output, shape index: {}]
  %s7 = sld [smem:[#allocation0]]
  $region50: #{tpu_custom_call.1} parent=0
    _
  %s9 = ssub.s32 1, %s7
  %s10 = scalar_select 0, %s9, %s7
  %11 = sst [smem:[#allocation2]] %s4
  $region1: #{tpu_custom_call.1} parent=0
    #allocation3 [shape = 'u8[131072]{0}', space=vmem, size = 0x20000, scoped, tag = 'input window, operand 0, single buffered']
    #allocation4 [shape = 's32[1]{0}', space=sflag, size = 0x4, scoped, tag = 'scoped memory for tpu_custom_call.1']
    #allocation5 [shape = 's32[1]{0}', space=sflag, size = 0x4, scoped, tag = 'scoped memory for tpu_custom_call.1']
    #allocation6 [shape = 'u8[16384]{0}', space=vmem, size = 0x4000, scoped, tag = 'input window, operand 1, single buffered']
    #allocation7 [shape = 's32[1]{0}', space=sflag, size = 0x4, scoped, tag = 'scoped memory for tpu_custom_call.1']
    #allocation8 [shape = 'u8[589824]{0}', space=vmem, size = 0x90000, scoped, tag = 'input window, operand 2, single buffered']
    #allocation9 [shape = 'u8[131072]{0}', space=vmem, size = 0x20000, scoped, tag = 'input window, operand 5, single buffered']
    #allocation10 [shape = 's32[1]{0}', space=sflag, size = 0x4, scoped, tag = 'scoped memory for tpu_custom_call.1']
    #allocation11 [shape = 'u8[1024]{0}', space=vmem, size = 0x400, scoped, tag = 'output window, operand 0, single buffered']
    %12 = vsyncpa [#allocation4], 0
    %13 = vsyncpa [#allocation7], 0
    %14 = vsyncpa [#allocation10], 0
    %15 = vsyncpa [#allocation5], 0
    // Predicated region
    $region2: #{tpu_custom_call.1} parent=1 // pred_check
      _
    $region3: #{tpu_custom_call.1} parent=1 // pred_check_branch
      %17 = sbr.rel (0) target = $region5
    $region4: #{tpu_custom_call.1} parent=1 // pred_region
      %s19 = ssub.s32 4096, 4096
      %20 = vsyncadd [#allocation4], %s19
      %s21 = sshll.u32 [#allocation3], 4
      %s22 = int_to_ptr.vmem [resolvable:$true] %s21
      %27 = dma.hbm_to_vmem [thread:$0]  %s0, 4096, %s22, [#allocation4], 64, 64, 4
    $region5: #{tpu_custom_call.1} parent=1 // pred_fallthru
      _
    // Predicated region
    $region6: #{tpu_custom_call.1} parent=1 // pred_check
      _
    $region7: #{tpu_custom_call.1} parent=1 // pred_check_branch
      %29 = sbr.rel (0) target = $region9
    $region8: #{tpu_custom_call.1} parent=1 // pred_region
      %s31 = ssub.s32 512, 512
      %32 = vsyncadd [#allocation7], %s31
      %s33 = sshll.u32 [#allocation6], 4
      %s34 = int_to_ptr.vmem [resolvable:$true] %s33
      %39 = dma.hbm_to_vmem [thread:$0]  %s1, 512, %s34, [#allocation7], 256, 256, 16
    $region9: #{tpu_custom_call.1} parent=1 // pred_fallthru
      _
    // Predicated region
    $region10: #{tpu_custom_call.1} parent=1 // pred_check
      _
    $region11: #{tpu_custom_call.1} parent=1 // pred_check_branch
      %41 = sbr.rel (0) target = $region13
    $region12: #{tpu_custom_call.1} parent=1 // pred_region
      %s43 = ssub.s32 18432, 18432
      %44 = vsyncadd [#allocation7], %s43
      %s45 = sshll.u32 [#allocation8], 4
      %s46 = int_to_ptr.vmem [resolvable:$true] %s45
      %51 = dma.hbm_to_vmem [thread:$0]  %s2, 18432, %s46, [#allocation7], 128, 128, 8
    $region13: #{tpu_custom_call.1} parent=1 // pred_fallthru
      _
    // Predicated region
    $region14: #{tpu_custom_call.1} parent=1 // pred_check
      _
    $region15: #{tpu_custom_call.1} parent=1 // pred_check_branch
      %53 = sbr.rel (0) target = $region17
    $region16: #{tpu_custom_call.1} parent=1 // pred_region
      _
    $region17: #{tpu_custom_call.1} parent=1 // pred_fallthru
      _
    // Predicated region
    $region18: #{tpu_custom_call.1} parent=1 // pred_check
      _
    $region19: #{tpu_custom_call.1} parent=1 // pred_check_branch
      %55 = sbr.rel (0) target = $region21
    $region20: #{tpu_custom_call.1} parent=1 // pred_region
      _
    $region21: #{tpu_custom_call.1} parent=1 // pred_fallthru
      _
    // Predicated region
    $region22: #{tpu_custom_call.1} parent=1 // pred_check
      _
    $region23: #{tpu_custom_call.1} parent=1 // pred_check_branch
      %57 = sbr.rel (0) target = $region25
    $region24: #{tpu_custom_call.1} parent=1 // pred_region
      %s59 = ssub.s32 4096, 4096
      %60 = vsyncadd [#allocation10], %s59
      %s61 = sshll.u32 [#allocation9], 4
      %s62 = int_to_ptr.vmem [resolvable:$true] %s61
      %67 = dma.hbm_to_vmem [thread:$0]  %s5, 4096, %s62, [#allocation10], 256, 256, 16
    $region25: #{tpu_custom_call.1} parent=1 // pred_fallthru
      _
    // Predicated region
    $region26: #{tpu_custom_call.1} parent=1 // pred_check
      _
    $region27: #{tpu_custom_call.1} parent=1 // pred_check_branch
      %69 = sbr.rel (0) target = $region29
    $region28: #{tpu_custom_call.1} parent=1 // pred_region
      %70 = dma.done [#allocation4], 4096
    $region29: #{tpu_custom_call.1} parent=1 // pred_fallthru
      _
    // Predicated region
    $region30: #{tpu_custom_call.1} parent=1 // pred_check
      _
    $region31: #{tpu_custom_call.1} parent=1 // pred_check_branch
      %72 = sbr.rel (0) target = $region33
    $region32: #{tpu_custom_call.1} parent=1 // pred_region
      %73 = dma.done [#allocation7], 512
    $region33: #{tpu_custom_call.1} parent=1 // pred_fallthru
      _
    // Predicated region
    $region34: #{tpu_custom_call.1} parent=1 // pred_check
      _
    $region35: #{tpu_custom_call.1} parent=1 // pred_check_branch
      %75 = sbr.rel (0) target = $region37
    $region36: #{tpu_custom_call.1} parent=1 // pred_region
      %76 = dma.done [#allocation7], 18432
    $region37: #{tpu_custom_call.1} parent=1 // pred_fallthru
      _
    // Predicated region
    $region38: #{tpu_custom_call.1} parent=1 // pred_check
      _
    $region39: #{tpu_custom_call.1} parent=1 // pred_check_branch
      %78 = sbr.rel (0) target = $region41
    $region40: #{tpu_custom_call.1} parent=1 // pred_region
      %79 = dma.done [#allocation10], 4096
    $region41: #{tpu_custom_call.1} parent=1 // pred_fallthru
      _
    %v81 = vld [vmem:[#allocation3] sm:$0xf]
    %v82 = vld [vmem:[#allocation3 + $0x4] sm:$0xf]
    %v83 = vld [vmem:[#allocation3 + $0x8] sm:$0xf]
    %v84 = vld [vmem:[#allocation3 + $0xc] sm:$0xf]
    %v85 = vld [vmem:[#allocation3 + $0x10] sm:$0xf]
    %v86 = vld [vmem:[#allocation3 + $0x14] sm:$0xf]
    %v87 = vld [vmem:[#allocation3 + $0x18] sm:$0xf]
    %v88 = vld [vmem:[#allocation3 + $0x1c] sm:$0xf]
    %v89 = vld [vmem:[#allocation3 + $0x20] sm:$0xf]
    %v90 = vld [vmem:[#allocation3 + $0x24] sm:$0xf]
    %v91 = vld [vmem:[#allocation3 + $0x28] sm:$0xf]
    %v92 = vld [vmem:[#allocation3 + $0x2c] sm:$0xf]
    %v93 = vld [vmem:[#allocation3 + $0x30] sm:$0xf]
    %v94 = vld [vmem:[#allocation3 + $0x34] sm:$0xf]
    %v95 = vld [vmem:[#allocation3 + $0x38] sm:$0xf]
    %v96 = vld [vmem:[#allocation3 + $0x3c] sm:$0xf]
    %v97 = vld [vmem:[#allocation3 + $0x40] sm:$0xf]
    %v98 = vld [vmem:[#allocation3 + $0x44] sm:$0xf]
    %v99 = vld [vmem:[#allocation3 + $0x48] sm:$0xf]
    %v100 = vld [vmem:[#allocation3 + $0x4c] sm:$0xf]
    %v101 = vld [vmem:[#allocation3 + $0x50] sm:$0xf]
    %v102 = vld [vmem:[#allocation3 + $0x54] sm:$0xf]
    %v103 = vld [vmem:[#allocation3 + $0x58] sm:$0xf]
    %v104 = vld [vmem:[#allocation3 + $0x5c] sm:$0xf]
    %v105 = vld [vmem:[#allocation3 + $0x60] sm:$0xf]
    %v106 = vld [vmem:[#allocation3 + $0x64] sm:$0xf]
    %v107 = vld [vmem:[#allocation3 + $0x68] sm:$0xf]
    %v108 = vld [vmem:[#allocation3 + $0x6c] sm:$0xf]
    %v109 = vld [vmem:[#allocation3 + $0x70] sm:$0xf]
    %v110 = vld [vmem:[#allocation3 + $0x74] sm:$0xf]
    %v111 = vld [vmem:[#allocation3 + $0x78] sm:$0xf]
    %v112 = vld [vmem:[#allocation3 + $0x7c] sm:$0xf]
    %v113 = vld [vmem:[#allocation3 + $0x80] sm:$0xf]
    %v114 = vld [vmem:[#allocation3 + $0x84] sm:$0xf]
    %v115 = vld [vmem:[#allocation3 + $0x88] sm:$0xf]
    %v116 = vld [vmem:[#allocation3 + $0x8c] sm:$0xf]
    %v117 = vld [vmem:[#allocation3 + $0x90] sm:$0xf]
    %v118 = vld [vmem:[#allocation3 + $0x94] sm:$0xf]
    %v119 = vld [vmem:[#allocation3 + $0x98] sm:$0xf]
    %v120 = vld [vmem:[#allocation3 + $0x9c] sm:$0xf]
    %v121 = vld [vmem:[#allocation3 + $0xa0] sm:$0xf]
    %v122 = vld [vmem:[#allocation3 + $0xa4] sm:$0xf]
    %v123 = vld [vmem:[#allocation3 + $0xa8] sm:$0xf]
    %v124 = vld [vmem:[#allocation3 + $0xac] sm:$0xf]
    %v125 = vld [vmem:[#allocation3 + $0xb0] sm:$0xf]
    %v126 = vld [vmem:[#allocation3 + $0xb4] sm:$0xf]
    %v127 = vld [vmem:[#allocation3 + $0xb8] sm:$0xf]
    %v128 = vld [vmem:[#allocation3 + $0xbc] sm:$0xf]
    %v129 = vld [vmem:[#allocation3 + $0xc0] sm:$0xf]
    %v130 = vld [vmem:[#allocation3 + $0xc4] sm:$0xf]
    %v131 = vld [vmem:[#allocation3 + $0xc8] sm:$0xf]
    %v132 = vld [vmem:[#allocation3 + $0xcc] sm:$0xf]
    %v133 = vld [vmem:[#allocation3 + $0xd0] sm:$0xf]
    %v134 = vld [vmem:[#allocation3 + $0xd4] sm:$0xf]
    %v135 = vld [vmem:[#allocation3 + $0xd8] sm:$0xf]
    %v136 = vld [vmem:[#allocation3 + $0xdc] sm:$0xf]
    %v137 = vld [vmem:[#allocation3 + $0xe0] sm:$0xf]
    %v138 = vld [vmem:[#allocation3 + $0xe4] sm:$0xf]
    %v139 = vld [vmem:[#allocation3 + $0xe8] sm:$0xf]
    %v140 = vld [vmem:[#allocation3 + $0xec] sm:$0xf]
    %v141 = vld [vmem:[#allocation3 + $0xf0] sm:$0xf]
    %v142 = vld [vmem:[#allocation3 + $0xf4] sm:$0xf]
    %v143 = vld [vmem:[#allocation3 + $0xf8] sm:$0xf]
    %v144 = vld [vmem:[#allocation3 + $0xfc] sm:$0xf]
    %v145 = vld [vmem:[%s3] sm:$0x3]
    %v146 = vld [vmem:[#allocation6] sm:$0xff]
    %v147 = vld [vmem:[#allocation6 + $0x8] sm:$0xff]
    %v148 = vld [vmem:[#allocation6 + $0x10] sm:$0x11]
    %v149 = vld [vmem:[#allocation6 + $0x18] sm:$0x11]
    %v154 = vunpack.c.l.b16 %v146
    %v155 = vunpack.c.h.b16 %v146
    %v156 = vunpack.c.l.b16 %v147
    %v157 = vunpack.c.h.b16 %v147
    %v158 = vunpack.c.l.b16 %v148
    %v159 = vunpack.c.h.b16 %v148
    %v160 = vunpack.c.l.b16 %v149
    %v161 = vunpack.c.h.b16 %v149
    %v162 = vpack.c.b16 %v158, %v154
    %v163 = vpack.c.b16 %v159, %v155
    %v164 = vpack.c.b16 %v160, %v156
    %v165 = vpack.c.b16 %v161, %v157
    %v234 = vunpack.c.l.b16 %v81
    %v235 = vunpack.c.l.b16 %v82
    %v236 = vunpack.c.l.b16 %v83
    %v237 = vunpack.c.l.b16 %v84
    %v238 = vunpack.c.l.b16 %v85
    %v239 = vunpack.c.l.b16 %v86
    %v240 = vunpack.c.l.b16 %v87
    %v241 = vunpack.c.l.b16 %v88
    %v242 = vunpack.c.l.b16 %v89
    %v243 = vunpack.c.l.b16 %v90
    %v244 = vunpack.c.l.b16 %v91
    %v245 = vunpack.c.l.b16 %v92
    %v246 = vunpack.c.l.b16 %v93
    %v247 = vunpack.c.l.b16 %v94
    %v248 = vunpack.c.l.b16 %v95
    %v249 = vunpack.c.l.b16 %v96
    %v250 = vunpack.c.l.b16 %v97
    %v251 = vunpack.c.l.b16 %v98
    %v252 = vunpack.c.l.b16 %v99
    %v253 = vunpack.c.l.b16 %v100
    %v254 = vunpack.c.l.b16 %v101
    %v255 = vunpack.c.l.b16 %v102
    %v256 = vunpack.c.l.b16 %v103
    %v257 = vunpack.c.l.b16 %v104
    %v258 = vunpack.c.l.b16 %v105
    %v259 = vunpack.c.l.b16 %v106
    %v260 = vunpack.c.l.b16 %v107
    %v261 = vunpack.c.l.b16 %v108
    %v262 = vunpack.c.l.b16 %v109
    %v263 = vunpack.c.l.b16 %v110
    %v264 = vunpack.c.l.b16 %v111
    %v265 = vunpack.c.l.b16 %v112
    %v266 = vunpack.c.l.b16 %v113
    %v267 = vunpack.c.l.b16 %v114
    %v268 = vunpack.c.l.b16 %v115
    %v269 = vunpack.c.l.b16 %v116
    %v270 = vunpack.c.l.b16 %v117
    %v271 = vunpack.c.l.b16 %v118
    %v272 = vunpack.c.l.b16 %v119
    %v273 = vunpack.c.l.b16 %v120
    %v274 = vunpack.c.l.b16 %v121
    %v275 = vunpack.c.l.b16 %v122
    %v276 = vunpack.c.l.b16 %v123
    %v277 = vunpack.c.l.b16 %v124
    %v278 = vunpack.c.l.b16 %v125
    %v279 = vunpack.c.l.b16 %v126
    %v280 = vunpack.c.l.b16 %v127
    %v281 = vunpack.c.l.b16 %v128
    %v282 = vunpack.c.l.b16 %v129
    %v283 = vunpack.c.l.b16 %v130
    %v284 = vunpack.c.l.b16 %v131
    %v285 = vunpack.c.l.b16 %v132
    %v286 = vunpack.c.l.b16 %v133
    %v287 = vunpack.c.l.b16 %v134
    %v288 = vunpack.c.l.b16 %v135
    %v289 = vunpack.c.l.b16 %v136
    %v290 = vunpack.c.l.b16 %v137
    %v291 = vunpack.c.l.b16 %v138
    %v292 = vunpack.c.l.b16 %v139
    %v293 = vunpack.c.l.b16 %v140
    %v294 = vunpack.c.l.b16 %v141
    %v295 = vunpack.c.l.b16 %v142
    %v296 = vunpack.c.l.b16 %v143
    %v297 = vunpack.c.l.b16 %v144
    %v298 = vpack.c.b16 %v235, %v234
    %v299 = vpack.c.b16 %v237, %v236
    %v300 = vpack.c.b16 %v239, %v238
    %v301 = vpack.c.b16 %v241, %v240
    %v302 = vpack.c.b16 %v243, %v242
    %v303 = vpack.c.b16 %v245, %v244
    %v304 = vpack.c.b16 %v247, %v246
    %v305 = vpack.c.b16 %v249, %v248
    %v306 = vpack.c.b16 %v251, %v250
    %v307 = vpack.c.b16 %v253, %v252
    %v308 = vpack.c.b16 %v255, %v254
    %v309 = vpack.c.b16 %v257, %v256
    %v310 = vpack.c.b16 %v259, %v258
    %v311 = vpack.c.b16 %v261, %v260
    %v312 = vpack.c.b16 %v263, %v262
    %v313 = vpack.c.b16 %v265, %v264
    %v314 = vpack.c.b16 %v267, %v266
    %v315 = vpack.c.b16 %v269, %v268
    %v316 = vpack.c.b16 %v271, %v270
    %v317 = vpack.c.b16 %v273, %v272
    %v318 = vpack.c.b16 %v275, %v274
    %v319 = vpack.c.b16 %v277, %v276
    %v320 = vpack.c.b16 %v279, %v278
    %v321 = vpack.c.b16 %v281, %v280
    %v322 = vpack.c.b16 %v283, %v282
    %v323 = vpack.c.b16 %v285, %v284
    %v324 = vpack.c.b16 %v287, %v286
    %v325 = vpack.c.b16 %v289, %v288
    %v326 = vpack.c.b16 %v291, %v290
    %v327 = vpack.c.b16 %v293, %v292
    %v328 = vpack.c.b16 %v295, %v294
    %v329 = vpack.c.b16 %v297, %v296
    %362 = vmatprep.subr.bf16.mxu0 0
    %363 = vmatpush1.bf16.msra.mxu0 %v298
    %364 = vmatprep.subr.bf16.mxu0 0
    %365 = vmatpush1.bf16.msra.mxu0 %v299
    %366 = vmatprep.subr.bf16.mxu0 0
    %367 = vmatpush1.bf16.msra.mxu0 %v300
    %368 = vmatprep.subr.bf16.mxu0 0
    %369 = vmatpush1.bf16.msra.mxu0 %v301
    %370 = vmatprep.subr.bf16.mxu0 0
    %371 = vmatpush1.bf16.msra.mxu0 %v302
    %372 = vmatprep.subr.bf16.mxu0 0
    %373 = vmatpush1.bf16.msra.mxu0 %v303
    %374 = vmatprep.subr.bf16.mxu0 0
    %375 = vmatpush1.bf16.msra.mxu0 %v304
    %376 = vmatprep.subr.bf16.mxu0 0
    %377 = vmatpush1.bf16.msra.mxu0 %v305
    %378 = vmatprep.subr.bf16.mxu0 0
    %379 = vmatpush1.bf16.msra.mxu0 %v306
    %380 = vmatprep.subr.bf16.mxu0 0
    %381 = vmatpush1.bf16.msra.mxu0 %v307
    %382 = vmatprep.subr.bf16.mxu0 0
    %383 = vmatpush1.bf16.msra.mxu0 %v308
    %384 = vmatprep.subr.bf16.mxu0 0
    %385 = vmatpush1.bf16.msra.mxu0 %v309
    %386 = vmatprep.subr.bf16.mxu0 0
    %387 = vmatpush1.bf16.msra.mxu0 %v310
    %388 = vmatprep.subr.bf16.mxu0 0
    %389 = vmatpush1.bf16.msra.mxu0 %v311
    %390 = vmatprep.subr.bf16.mxu0 0
    %391 = vmatpush1.bf16.msra.mxu0 %v312
    %392 = vmatprep.subr.bf16.mxu0 0
    %393 = vmatpush1.bf16.msra.mxu0 %v313
    %394 = vmatprep.mubr.bf16.mxu0 %v163
    %395 = vmatmul.mubr.bf16.gmra.mrb[0].mxu0 %v162
    %v396 = vpop.f32.mrb[0].mxu0
    %v397 = vadd.f32 0.0, %v396
    %v398 = vpop.f32.mrb[0].mxu0
    %v399 = vpop.f32.mrb[0].mxu0
    %v400 = vadd.f32 0.0, %v399
    %v401 = vpop.f32.mrb[0].mxu0
    %402 = vdwg.mxu0
    %403 = vmatprep.subr.bf16.mxu0 0
    %404 = vmatpush1.bf16.msra.mxu0 %v314
    %405 = vmatprep.subr.bf16.mxu0 0
    %406 = vmatpush1.bf16.msra.mxu0 %v315
    %407 = vmatprep.subr.bf16.mxu0 0
    %408 = vmatpush1.bf16.msra.mxu0 %v316
    %409 = vmatprep.subr.bf16.mxu0 0
    %410 = vmatpush1.bf16.msra.mxu0 %v317
    %411 = vmatprep.subr.bf16.mxu0 0
    %412 = vmatpush1.bf16.msra.mxu0 %v318
    %413 = vmatprep.subr.bf16.mxu0 0
    %414 = vmatpush1.bf16.msra.mxu0 %v319
    %415 = vmatprep.subr.bf16.mxu0 0
    %416 = vmatpush1.bf16.msra.mxu0 %v320
    %417 = vmatprep.subr.bf16.mxu0 0
    %418 = vmatpush1.bf16.msra.mxu0 %v321
    %419 = vmatprep.subr.bf16.mxu0 0
    %420 = vmatpush1.bf16.msra.mxu0 %v322
    %421 = vmatprep.subr.bf16.mxu0 0
    %422 = vmatpush1.bf16.msra.mxu0 %v323
    %423 = vmatprep.subr.bf16.mxu0 0
    %424 = vmatpush1.bf16.msra.mxu0 %v324
    %425 = vmatprep.subr.bf16.mxu0 0
    %426 = vmatpush1.bf16.msra.mxu0 %v325
    %427 = vmatprep.subr.bf16.mxu0 0
    %428 = vmatpush1.bf16.msra.mxu0 %v326
    %429 = vmatprep.subr.bf16.mxu0 0
    %430 = vmatpush1.bf16.msra.mxu0 %v327
    %431 = vmatprep.subr.bf16.mxu0 0
    %432 = vmatpush1.bf16.msra.mxu0 %v328
    %433 = vmatprep.subr.bf16.mxu0 0
    %434 = vmatpush1.bf16.msra.mxu0 %v329
    %435 = vmatprep.mubr.bf16.mxu0 %v165
    %436 = vmatmul.mubr.bf16.gmra.mrb[0].mxu0 %v164
    %v437 = vpop.f32.mrb[0].mxu0
    %v438 = vadd.f32 %v397, %v437
    %v439 = vpop.f32.mrb[0].mxu0
    %v440 = vpop.f32.mrb[0].mxu0
    %v441 = vadd.f32 %v400, %v440
    %v442 = vpop.f32.mrb[0].mxu0
    %443 = vdwg.mxu0
    %v444 = vld [vmem:[#allocation8] sm:$0xff]
    %v445 = vld [vmem:[#allocation8 + $0x8] sm:$0xff]
    %v446 = vld [vmem:[#allocation8 + $0x10] sm:$0xff]
    %v447 = vld [vmem:[#allocation8 + $0x18] sm:$0xff]
    %v448 = vld [vmem:[#allocation8 + $0x20] sm:$0xff]
    %v449 = vld [vmem:[#allocation8 + $0x28] sm:$0xff]
    %v450 = vld [vmem:[#allocation8 + $0x30] sm:$0xff]
    %v451 = vld [vmem:[#allocation8 + $0x38] sm:$0xff]
    %v452 = vld [vmem:[#allocation8 + $0x40] sm:$0xff]
    %v453 = vld [vmem:[#allocation8 + $0x48] sm:$0xff]
    %v454 = vld [vmem:[#allocation8 + $0x50] sm:$0xff]
    %v455 = vld [vmem:[#allocation8 + $0x58] sm:$0xff]
    %v456 = vld [vmem:[#allocation8 + $0x60] sm:$0xff]
    %v457 = vld [vmem:[#allocation8 + $0x68] sm:$0xff]
    %v458 = vld [vmem:[#allocation8 + $0x70] sm:$0xff]
    %v459 = vld [vmem:[#allocation8 + $0x78] sm:$0xff]
    %s460 = scalar_lea.vmem [#allocation8], 128
    %v461 = vld [vmem:[%s460] sm:$0xff]
    %v462 = vld [vmem:[%s460 + $0x8] sm:$0xff]
    %v463 = vld [vmem:[%s460 + $0x10] sm:$0xff]
    %v464 = vld [vmem:[%s460 + $0x18] sm:$0xff]
    %v465 = vld [vmem:[%s460 + $0x20] sm:$0xff]
    %v466 = vld [vmem:[%s460 + $0x28] sm:$0xff]
    %v467 = vld [vmem:[%s460 + $0x30] sm:$0xff]
    %v468 = vld [vmem:[%s460 + $0x38] sm:$0xff]
    %v469 = vld [vmem:[%s460 + $0x40] sm:$0xff]
    %v470 = vld [vmem:[%s460 + $0x48] sm:$0xff]
    %v471 = vld [vmem:[%s460 + $0x50] sm:$0xff]
    %v472 = vld [vmem:[%s460 + $0x58] sm:$0xff]
    %v473 = vld [vmem:[%s460 + $0x60] sm:$0xff]
    %v474 = vld [vmem:[%s460 + $0x68] sm:$0xff]
    %v475 = vld [vmem:[%s460 + $0x70] sm:$0xff]
    %v476 = vld [vmem:[%s460 + $0x78] sm:$0xff]
    %v478 = vrot.slane %v438, 1
    %480 = vmatprep.subr.mxu0 0.0
    %481 = vmatpush1.msra.mxu0 %v461
    %482 = vmatprep.subr.mxu0 0.0
    %483 = vmatpush1.msra.mxu0 %v462
    %484 = vmatprep.subr.mxu0 0.0
    %485 = vmatpush1.msra.mxu0 %v463
    %486 = vmatprep.subr.mxu0 0.0
    %487 = vmatpush1.msra.mxu0 %v464
    %488 = vmatprep.subr.mxu0 0.0
    %489 = vmatpush1.msra.mxu0 %v465
    %490 = vmatprep.subr.mxu0 0.0
    %491 = vmatpush1.msra.mxu0 %v466
    %492 = vmatprep.subr.mxu0 0.0
    %493 = vmatpush1.msra.mxu0 %v467
    %494 = vmatprep.subr.mxu0 0.0
    %495 = vmatpush1.msra.mxu0 %v468
    %496 = vmatprep.subr.mxu0 0.0
    %497 = vmatpush1.msra.mxu0 %v469
    %498 = vmatprep.subr.mxu0 0.0
    %499 = vmatpush1.msra.mxu0 %v470
    %500 = vmatprep.subr.mxu0 0.0
    %501 = vmatpush1.msra.mxu0 %v471
    %502 = vmatprep.subr.mxu0 0.0
    %503 = vmatpush1.msra.mxu0 %v472
    %504 = vmatprep.subr.mxu0 0.0
    %505 = vmatpush1.msra.mxu0 %v473
    %506 = vmatprep.subr.mxu0 0.0
    %507 = vmatpush1.msra.mxu0 %v474
    %508 = vmatprep.subr.mxu0 0.0
    %509 = vmatpush1.msra.mxu0 %v475
    %510 = vmatprep.subr.mxu0 0.0
    %511 = vmatpush1.msra.mxu0 %v476
    %512 = vmatprep.subr.mxu0 0.0
    %513 = vmatpush1.msra.mxu0 0.0
    %514 = vmatprep.subr.mxu0 0.0
    %515 = vmatpush1.msra.mxu0 0.0
    %516 = vmatprep.subr.mxu0 0.0
    %517 = vmatpush1.msra.mxu0 0.0
    %518 = vmatprep.subr.mxu0 0.0
    %519 = vmatpush1.msra.mxu0 0.0
    %520 = vmatprep.subr.mxu0 0.0
    %521 = vmatpush1.msra.mxu0 0.0
    %522 = vmatprep.subr.mxu0 0.0
    %523 = vmatpush1.msra.mxu0 0.0
    %524 = vmatprep.subr.mxu0 0.0
    %525 = vmatpush1.msra.mxu0 0.0
    %526 = vmatprep.subr.mxu0 0.0
    %527 = vmatpush1.msra.mxu0 0.0
    %528 = vmatprep.subr.mxu0 0.0
    %529 = vmatpush1.msra.mxu0 0.0
    %530 = vmatprep.subr.mxu0 0.0
    %531 = vmatpush1.msra.mxu0 0.0
    %532 = vmatprep.subr.mxu0 0.0
    %533 = vmatpush1.msra.mxu0 0.0
    %534 = vmatprep.subr.mxu0 0.0
    %535 = vmatpush1.msra.mxu0 0.0
    %536 = vmatprep.subr.mxu0 0.0
    %537 = vmatpush1.msra.mxu0 0.0
    %538 = vmatprep.subr.mxu0 0.0
    %539 = vmatpush1.msra.mxu0 0.0
    %540 = vmatprep.subr.mxu0 0.0
    %541 = vmatpush1.msra.mxu0 0.0
    %542 = vmatprep.subr.mxu0 0.0
    %543 = vmatpush1.msra.mxu0 0.0
    %544 = vmatprep.mubr.f32.mxu0 0.0
    %545 = vmatmul.mubr.f32.gmra.mrb[0].mxu0 %v478
    %v546 = vpop.f32.mrb[0].mxu0
    %v547 = vadd.f32 0.0, %v546
    %v548 = vpop.f32.mrb[0].mxu0
    %549 = vdwg.mxu0
    %550 = vmatprep.subr.mxu0 0.0
    %551 = vmatpush1.msra.mxu0 %v444
    %552 = vmatprep.subr.mxu0 0.0
    %553 = vmatpush1.msra.mxu0 %v445
    %554 = vmatprep.subr.mxu0 0.0
    %555 = vmatpush1.msra.mxu0 %v446
    %556 = vmatprep.subr.mxu0 0.0
    %557 = vmatpush1.msra.mxu0 %v447
    %558 = vmatprep.subr.mxu0 0.0
    %559 = vmatpush1.msra.mxu0 %v448
    %560 = vmatprep.subr.mxu0 0.0
    %561 = vmatpush1.msra.mxu0 %v449
    %562 = vmatprep.subr.mxu0 0.0
    %563 = vmatpush1.msra.mxu0 %v450
    %564 = vmatprep.subr.mxu0 0.0
    %565 = vmatpush1.msra.mxu0 %v451
    %566 = vmatprep.subr.mxu0 0.0
    %567 = vmatpush1.msra.mxu0 %v452
    %568 = vmatprep.subr.mxu0 0.0
    %569 = vmatpush1.msra.mxu0 %v453
    %570 = vmatprep.subr.mxu0 0.0
    %571 = vmatpush1.msra.mxu0 %v454
    %572 = vmatprep.subr.mxu0 0.0
    %573 = vmatpush1.msra.mxu0 %v455
    %574 = vmatprep.subr.mxu0 0.0
    %575 = vmatpush1.msra.mxu0 %v456
    %576 = vmatprep.subr.mxu0 0.0
    %577 = vmatpush1.msra.mxu0 %v457
    %578 = vmatprep.subr.mxu0 0.0
    %579 = vmatpush1.msra.mxu0 %v458
    %580 = vmatprep.subr.mxu0 0.0
    %581 = vmatpush1.msra.mxu0 %v459
    %582 = vmatprep.subr.mxu0 0.0
    %583 = vmatpush1.msra.mxu0 0.0
    %584 = vmatprep.subr.mxu0 0.0
    %585 = vmatpush1.msra.mxu0 0.0
    %586 = vmatprep.subr.mxu0 0.0
    %587 = vmatpush1.msra.mxu0 0.0
    %588 = vmatprep.subr.mxu0 0.0
    %589 = vmatpush1.msra.mxu0 0.0
    %590 = vmatprep.subr.mxu0 0.0
    %591 = vmatpush1.msra.mxu0 0.0
    %592 = vmatprep.subr.mxu0 0.0
    %593 = vmatpush1.msra.mxu0 0.0
    %594 = vmatprep.subr.mxu0 0.0
    %595 = vmatpush1.msra.mxu0 0.0
    %596 = vmatprep.subr.mxu0 0.0
    %597 = vmatpush1.msra.mxu0 0.0
    %598 = vmatprep.subr.mxu0 0.0
    %599 = vmatpush1.msra.mxu0 0.0
    %600 = vmatprep.subr.mxu0 0.0
    %601 = vmatpush1.msra.mxu0 0.0
    %602 = vmatprep.subr.mxu0 0.0
    %603 = vmatpush1.msra.mxu0 0.0
    %604 = vmatprep.subr.mxu0 0.0
    %605 = vmatpush1.msra.mxu0 0.0
    %606 = vmatprep.subr.mxu0 0.0
    %607 = vmatpush1.msra.mxu0 0.0
    %608 = vmatprep.subr.mxu0 0.0
    %609 = vmatpush1.msra.mxu0 0.0
    %610 = vmatprep.subr.mxu0 0.0
    %611 = vmatpush1.msra.mxu0 0.0
    %612 = vmatprep.subr.mxu0 0.0
    %613 = vmatpush1.msra.mxu0 0.0
    %614 = vmatprep.mubr.f32.mxu0 0.0
    %615 = vmatmul.mubr.f32.gmra.mrb[0].mxu0 %v438
    %v616 = vpop.f32.mrb[0].mxu0
    %v617 = vadd.f32 %v547, %v616
    %v618 = vpop.f32.mrb[0].mxu0
    %619 = vdwg.mxu0
    %s620 = scalar_lea.vmem [#allocation8], 256
    %v621 = vld [vmem:[%s620] sm:$0xff]
    %v622 = vld [vmem:[%s620 + $0x8] sm:$0xff]
    %v623 = vld [vmem:[%s620 + $0x10] sm:$0xff]
    %v624 = vld [vmem:[%s620 + $0x18] sm:$0xff]
    %v625 = vld [vmem:[%s620 + $0x20] sm:$0xff]
    %v626 = vld [vmem:[%s620 + $0x28] sm:$0xff]
    %v627 = vld [vmem:[%s620 + $0x30] sm:$0xff]
    %v628 = vld [vmem:[%s620 + $0x38] sm:$0xff]
    %v629 = vld [vmem:[%s620 + $0x40] sm:$0xff]
    %v630 = vld [vmem:[%s620 + $0x48] sm:$0xff]
    %v631 = vld [vmem:[%s620 + $0x50] sm:$0xff]
    %v632 = vld [vmem:[%s620 + $0x58] sm:$0xff]
    %v633 = vld [vmem:[%s620 + $0x60] sm:$0xff]
    %v634 = vld [vmem:[%s620 + $0x68] sm:$0xff]
    %v635 = vld [vmem:[%s620 + $0x70] sm:$0xff]
    %v636 = vld [vmem:[%s620 + $0x78] sm:$0xff]
    %v637 = vrot.slane %v438, 2
    %639 = vmatprep.subr.mxu0 0.0
    %640 = vmatpush1.msra.mxu0 %v621
    %641 = vmatprep.subr.mxu0 0.0
    %642 = vmatpush1.msra.mxu0 %v622
    %643 = vmatprep.subr.mxu0 0.0
    %644 = vmatpush1.msra.mxu0 %v623
    %645 = vmatprep.subr.mxu0 0.0
    %646 = vmatpush1.msra.mxu0 %v624
    %647 = vmatprep.subr.mxu0 0.0
    %648 = vmatpush1.msra.mxu0 %v625
    %649 = vmatprep.subr.mxu0 0.0
    %650 = vmatpush1.msra.mxu0 %v626
    %651 = vmatprep.subr.mxu0 0.0
    %652 = vmatpush1.msra.mxu0 %v627
    %653 = vmatprep.subr.mxu0 0.0
    %654 = vmatpush1.msra.mxu0 %v628
    %655 = vmatprep.subr.mxu0 0.0
    %656 = vmatpush1.msra.mxu0 %v629
    %657 = vmatprep.subr.mxu0 0.0
    %658 = vmatpush1.msra.mxu0 %v630
    %659 = vmatprep.subr.mxu0 0.0
    %660 = vmatpush1.msra.mxu0 %v631
    %661 = vmatprep.subr.mxu0 0.0
    %662 = vmatpush1.msra.mxu0 %v632
    %663 = vmatprep.subr.mxu0 0.0
    %664 = vmatpush1.msra.mxu0 %v633
    %665 = vmatprep.subr.mxu0 0.0
    %666 = vmatpush1.msra.mxu0 %v634
    %667 = vmatprep.subr.mxu0 0.0
    %668 = vmatpush1.msra.mxu0 %v635
    %669 = vmatprep.subr.mxu0 0.0
    %670 = vmatpush1.msra.mxu0 %v636
    %671 = vmatprep.subr.mxu0 0.0
    %672 = vmatpush1.msra.mxu0 0.0
    %673 = vmatprep.subr.mxu0 0.0
    %674 = vmatpush1.msra.mxu0 0.0
    %675 = vmatprep.subr.mxu0 0.0
    %676 = vmatpush1.msra.mxu0 0.0
    %677 = vmatprep.subr.mxu0 0.0
    %678 = vmatpush1.msra.mxu0 0.0
    %679 = vmatprep.subr.mxu0 0.0
    %680 = vmatpush1.msra.mxu0 0.0
    %681 = vmatprep.subr.mxu0 0.0
    %682 = vmatpush1.msra.mxu0 0.0
    %683 = vmatprep.subr.mxu0 0.0
    %684 = vmatpush1.msra.mxu0 0.0
    %685 = vmatprep.subr.mxu0 0.0
    %686 = vmatpush1.msra.mxu0 0.0
    %687 = vmatprep.subr.mxu0 0.0
    %688 = vmatpush1.msra.mxu0 0.0
    %689 = vmatprep.subr.mxu0 0.0
    %690 = vmatpush1.msra.mxu0 0.0
    %691 = vmatprep.subr.mxu0 0.0
    %692 = vmatpush1.msra.mxu0 0.0
    %693 = vmatprep.subr.mxu0 0.0
    %694 = vmatpush1.msra.mxu0 0.0
    %695 = vmatprep.subr.mxu0 0.0
    %696 = vmatpush1.msra.mxu0 0.0
    %697 = vmatprep.subr.mxu0 0.0
    %698 = vmatpush1.msra.mxu0 0.0
    %699 = vmatprep.subr.mxu0 0.0
    %700 = vmatpush1.msra.mxu0 0.0
    %701 = vmatprep.subr.mxu0 0.0
    %702 = vmatpush1.msra.mxu0 0.0
    %703 = vmatprep.mubr.f32.mxu0 0.0
    %704 = vmatmul.mubr.f32.gmra.mrb[0].mxu0 %v637
    %v705 = vpop.f32.mrb[0].mxu0
    %v706 = vadd.f32 0.0, %v705
    %v707 = vpop.f32.mrb[0].mxu0
    %708 = vdwg.mxu0
    %v709 = vadd.f32 %v617, %v706
    %s710 = scalar_lea.vmem [#allocation8], 384
    %v711 = vld [vmem:[%s710] sm:$0xff]
    %v712 = vld [vmem:[%s710 + $0x8] sm:$0xff]
    %v713 = vld [vmem:[%s710 + $0x10] sm:$0xff]
    %v714 = vld [vmem:[%s710 + $0x18] sm:$0xff]
    %v715 = vld [vmem:[%s710 + $0x20] sm:$0xff]
    %v716 = vld [vmem:[%s710 + $0x28] sm:$0xff]
    %v717 = vld [vmem:[%s710 + $0x30] sm:$0xff]
    %v718 = vld [vmem:[%s710 + $0x38] sm:$0xff]
    %v719 = vld [vmem:[%s710 + $0x40] sm:$0xff]
    %v720 = vld [vmem:[%s710 + $0x48] sm:$0xff]
    %v721 = vld [vmem:[%s710 + $0x50] sm:$0xff]
    %v722 = vld [vmem:[%s710 + $0x58] sm:$0xff]
    %v723 = vld [vmem:[%s710 + $0x60] sm:$0xff]
    %v724 = vld [vmem:[%s710 + $0x68] sm:$0xff]
    %v725 = vld [vmem:[%s710 + $0x70] sm:$0xff]
    %v726 = vld [vmem:[%s710 + $0x78] sm:$0xff]
    %v727 = vrot.slane %v438, 3
    %729 = vmatprep.subr.mxu0 0.0
    %730 = vmatpush1.msra.mxu0 %v711
    %731 = vmatprep.subr.mxu0 0.0
    %732 = vmatpush1.msra.mxu0 %v712
    %733 = vmatprep.subr.mxu0 0.0
    %734 = vmatpush1.msra.mxu0 %v713
    %735 = vmatprep.subr.mxu0 0.0
    %736 = vmatpush1.msra.mxu0 %v714
    %737 = vmatprep.subr.mxu0 0.0
    %738 = vmatpush1.msra.mxu0 %v715
    %739 = vmatprep.subr.mxu0 0.0
    %740 = vmatpush1.msra.mxu0 %v716
    %741 = vmatprep.subr.mxu0 0.0
    %742 = vmatpush1.msra.mxu0 %v717
    %743 = vmatprep.subr.mxu0 0.0
    %744 = vmatpush1.msra.mxu0 %v718
    %745 = vmatprep.subr.mxu0 0.0
    %746 = vmatpush1.msra.mxu0 %v719
    %747 = vmatprep.subr.mxu0 0.0
    %748 = vmatpush1.msra.mxu0 %v720
    %749 = vmatprep.subr.mxu0 0.0
    %750 = vmatpush1.msra.mxu0 %v721
    %751 = vmatprep.subr.mxu0 0.0
    %752 = vmatpush1.msra.mxu0 %v722
    %753 = vmatprep.subr.mxu0 0.0
    %754 = vmatpush1.msra.mxu0 %v723
    %755 = vmatprep.subr.mxu0 0.0
    %756 = vmatpush1.msra.mxu0 %v724
    %757 = vmatprep.subr.mxu0 0.0
    %758 = vmatpush1.msra.mxu0 %v725
    %759 = vmatprep.subr.mxu0 0.0
    %760 = vmatpush1.msra.mxu0 %v726
    %761 = vmatprep.subr.mxu0 0.0
    %762 = vmatpush1.msra.mxu0 0.0
    %763 = vmatprep.subr.mxu0 0.0
    %764 = vmatpush1.msra.mxu0 0.0
    %765 = vmatprep.subr.mxu0 0.0
    %766 = vmatpush1.msra.mxu0 0.0
    %767 = vmatprep.subr.mxu0 0.0
    %768 = vmatpush1.msra.mxu0 0.0
    %769 = vmatprep.subr.mxu0 0.0
    %770 = vmatpush1.msra.mxu0 0.0
    %771 = vmatprep.subr.mxu0 0.0
    %772 = vmatpush1.msra.mxu0 0.0
    %773 = vmatprep.subr.mxu0 0.0
    %774 = vmatpush1.msra.mxu0 0.0
    %775 = vmatprep.subr.mxu0 0.0
    %776 = vmatpush1.msra.mxu0 0.0
    %777 = vmatprep.subr.mxu0 0.0
    %778 = vmatpush1.msra.mxu0 0.0
    %779 = vmatprep.subr.mxu0 0.0
    %780 = vmatpush1.msra.mxu0 0.0
    %781 = vmatprep.subr.mxu0 0.0
    %782 = vmatpush1.msra.mxu0 0.0
    %783 = vmatprep.subr.mxu0 0.0
    %784 = vmatpush1.msra.mxu0 0.0
    %785 = vmatprep.subr.mxu0 0.0
    %786 = vmatpush1.msra.mxu0 0.0
    %787 = vmatprep.subr.mxu0 0.0
    %788 = vmatpush1.msra.mxu0 0.0
    %789 = vmatprep.subr.mxu0 0.0
    %790 = vmatpush1.msra.mxu0 0.0
    %791 = vmatprep.subr.mxu0 0.0
    %792 = vmatpush1.msra.mxu0 0.0
    %793 = vmatprep.mubr.f32.mxu0 0.0
    %794 = vmatmul.mubr.f32.gmra.mrb[0].mxu0 %v727
    %v795 = vpop.f32.mrb[0].mxu0
    %v796 = vadd.f32 0.0, %v795
    %v797 = vpop.f32.mrb[0].mxu0
    %798 = vdwg.mxu0
    %v799 = vadd.f32 %v709, %v796
    %s800 = scalar_lea.vmem [#allocation8], 512
    %v801 = vld [vmem:[%s800] sm:$0xff]
    %v802 = vld [vmem:[%s800 + $0x8] sm:$0xff]
    %v803 = vld [vmem:[%s800 + $0x10] sm:$0xff]
    %v804 = vld [vmem:[%s800 + $0x18] sm:$0xff]
    %v805 = vld [vmem:[%s800 + $0x20] sm:$0xff]
    %v806 = vld [vmem:[%s800 + $0x28] sm:$0xff]
    %v807 = vld [vmem:[%s800 + $0x30] sm:$0xff]
    %v808 = vld [vmem:[%s800 + $0x38] sm:$0xff]
    %v809 = vld [vmem:[%s800 + $0x40] sm:$0xff]
    %v810 = vld [vmem:[%s800 + $0x48] sm:$0xff]
    %v811 = vld [vmem:[%s800 + $0x50] sm:$0xff]
    %v812 = vld [vmem:[%s800 + $0x58] sm:$0xff]
    %v813 = vld [vmem:[%s800 + $0x60] sm:$0xff]
    %v814 = vld [vmem:[%s800 + $0x68] sm:$0xff]
    %v815 = vld [vmem:[%s800 + $0x70] sm:$0xff]
    %v816 = vld [vmem:[%s800 + $0x78] sm:$0xff]
    %v817 = vrot.slane %v438, 4
    %819 = vmatprep.subr.mxu0 0.0
    %820 = vmatpush1.msra.mxu0 %v801
    %821 = vmatprep.subr.mxu0 0.0
    %822 = vmatpush1.msra.mxu0 %v802
    %823 = vmatprep.subr.mxu0 0.0
    %824 = vmatpush1.msra.mxu0 %v803
    %825 = vmatprep.subr.mxu0 0.0
    %826 = vmatpush1.msra.mxu0 %v804
    %827 = vmatprep.subr.mxu0 0.0
    %828 = vmatpush1.msra.mxu0 %v805
    %829 = vmatprep.subr.mxu0 0.0
    %830 = vmatpush1.msra.mxu0 %v806
    %831 = vmatprep.subr.mxu0 0.0
    %832 = vmatpush1.msra.mxu0 %v807
    %833 = vmatprep.subr.mxu0 0.0
    %834 = vmatpush1.msra.mxu0 %v808
    %835 = vmatprep.subr.mxu0 0.0
    %836 = vmatpush1.msra.mxu0 %v809
    %837 = vmatprep.subr.mxu0 0.0
    %838 = vmatpush1.msra.mxu0 %v810
    %839 = vmatprep.subr.mxu0 0.0
    %840 = vmatpush1.msra.mxu0 %v811
    %841 = vmatprep.subr.mxu0 0.0
    %842 = vmatpush1.msra.mxu0 %v812
    %843 = vmatprep.subr.mxu0 0.0
    %844 = vmatpush1.msra.mxu0 %v813
    %845 = vmatprep.subr.mxu0 0.0
    %846 = vmatpush1.msra.mxu0 %v814
    %847 = vmatprep.subr.mxu0 0.0
    %848 = vmatpush1.msra.mxu0 %v815
    %849 = vmatprep.subr.mxu0 0.0
    %850 = vmatpush1.msra.mxu0 %v816
    %851 = vmatprep.subr.mxu0 0.0
    %852 = vmatpush1.msra.mxu0 0.0
    %853 = vmatprep.subr.mxu0 0.0
    %854 = vmatpush1.msra.mxu0 0.0
    %855 = vmatprep.subr.mxu0 0.0
    %856 = vmatpush1.msra.mxu0 0.0
    %857 = vmatprep.subr.mxu0 0.0
    %858 = vmatpush1.msra.mxu0 0.0
    %859 = vmatprep.subr.mxu0 0.0
    %860 = vmatpush1.msra.mxu0 0.0
    %861 = vmatprep.subr.mxu0 0.0
    %862 = vmatpush1.msra.mxu0 0.0
    %863 = vmatprep.subr.mxu0 0.0
    %864 = vmatpush1.msra.mxu0 0.0
    %865 = vmatprep.subr.mxu0 0.0
    %866 = vmatpush1.msra.mxu0 0.0
    %867 = vmatprep.subr.mxu0 0.0
    %868 = vmatpush1.msra.mxu0 0.0
    %869 = vmatprep.subr.mxu0 0.0
    %870 = vmatpush1.msra.mxu0 0.0
    %871 = vmatprep.subr.mxu0 0.0
    %872 = vmatpush1.msra.mxu0 0.0
    %873 = vmatprep.subr.mxu0 0.0
    %874 = vmatpush1.msra.mxu0 0.0
    %875 = vmatprep.subr.mxu0 0.0
    %876 = vmatpush1.msra.mxu0 0.0
    %877 = vmatprep.subr.mxu0 0.0
    %878 = vmatpush1.msra.mxu0 0.0
    %879 = vmatprep.subr.mxu0 0.0
    %880 = vmatpush1.msra.mxu0 0.0
    %881 = vmatprep.subr.mxu0 0.0
    %882 = vmatpush1.msra.mxu0 0.0
    %883 = vmatprep.mubr.f32.mxu0 0.0
    %884 = vmatmul.mubr.f32.gmra.mrb[0].mxu0 %v817
    %v885 = vpop.f32.mrb[0].mxu0
    %v886 = vadd.f32 0.0, %v885
    %v887 = vpop.f32.mrb[0].mxu0
    %888 = vdwg.mxu0
    %v889 = vadd.f32 %v799, %v886
    %s890 = scalar_lea.vmem [#allocation8], 640
    %v891 = vld [vmem:[%s890] sm:$0xff]
    %v892 = vld [vmem:[%s890 + $0x8] sm:$0xff]
    %v893 = vld [vmem:[%s890 + $0x10] sm:$0xff]
    %v894 = vld [vmem:[%s890 + $0x18] sm:$0xff]
    %v895 = vld [vmem:[%s890 + $0x20] sm:$0xff]
    %v896 = vld [vmem:[%s890 + $0x28] sm:$0xff]
    %v897 = vld [vmem:[%s890 + $0x30] sm:$0xff]
    %v898 = vld [vmem:[%s890 + $0x38] sm:$0xff]
    %v899 = vld [vmem:[%s890 + $0x40] sm:$0xff]
    %v900 = vld [vmem:[%s890 + $0x48] sm:$0xff]
    %v901 = vld [vmem:[%s890 + $0x50] sm:$0xff]
    %v902 = vld [vmem:[%s890 + $0x58] sm:$0xff]
    %v903 = vld [vmem:[%s890 + $0x60] sm:$0xff]
    %v904 = vld [vmem:[%s890 + $0x68] sm:$0xff]
    %v905 = vld [vmem:[%s890 + $0x70] sm:$0xff]
    %v906 = vld [vmem:[%s890 + $0x78] sm:$0xff]
    %v907 = vrot.slane %v438, 5
    %909 = vmatprep.subr.mxu0 0.0
    %910 = vmatpush1.msra.mxu0 %v891
    %911 = vmatprep.subr.mxu0 0.0
    %912 = vmatpush1.msra.mxu0 %v892
    %913 = vmatprep.subr.mxu0 0.0
    %914 = vmatpush1.msra.mxu0 %v893
    %915 = vmatprep.subr.mxu0 0.0
    %916 = vmatpush1.msra.mxu0 %v894
    %917 = vmatprep.subr.mxu0 0.0
    %918 = vmatpush1.msra.mxu0 %v895
    %919 = vmatprep.subr.mxu0 0.0
    %920 = vmatpush1.msra.mxu0 %v896
    %921 = vmatprep.subr.mxu0 0.0
    %922 = vmatpush1.msra.mxu0 %v897
    %923 = vmatprep.subr.mxu0 0.0
    %924 = vmatpush1.msra.mxu0 %v898
    %925 = vmatprep.subr.mxu0 0.0
    %926 = vmatpush1.msra.mxu0 %v899
    %927 = vmatprep.subr.mxu0 0.0
    %928 = vmatpush1.msra.mxu0 %v900
    %929 = vmatprep.subr.mxu0 0.0
    %930 = vmatpush1.msra.mxu0 %v901
    %931 = vmatprep.subr.mxu0 0.0
    %932 = vmatpush1.msra.mxu0 %v902
    %933 = vmatprep.subr.mxu0 0.0
    %934 = vmatpush1.msra.mxu0 %v903
    %935 = vmatprep.subr.mxu0 0.0
    %936 = vmatpush1.msra.mxu0 %v904
    %937 = vmatprep.subr.mxu0 0.0
    %938 = vmatpush1.msra.mxu0 %v905
    %939 = vmatprep.subr.mxu0 0.0
    %940 = vmatpush1.msra.mxu0 %v906
    %941 = vmatprep.subr.mxu0 0.0
    %942 = vmatpush1.msra.mxu0 0.0
    %943 = vmatprep.subr.mxu0 0.0
    %944 = vmatpush1.msra.mxu0 0.0
    %945 = vmatprep.subr.mxu0 0.0
    %946 = vmatpush1.msra.mxu0 0.0
    %947 = vmatprep.subr.mxu0 0.0
    %948 = vmatpush1.msra.mxu0 0.0
    %949 = vmatprep.subr.mxu0 0.0
    %950 = vmatpush1.msra.mxu0 0.0
    %951 = vmatprep.subr.mxu0 0.0
    %952 = vmatpush1.msra.mxu0 0.0
    %953 = vmatprep.subr.mxu0 0.0
    %954 = vmatpush1.msra.mxu0 0.0
    %955 = vmatprep.subr.mxu0 0.0
    %956 = vmatpush1.msra.mxu0 0.0
    %957 = vmatprep.subr.mxu0 0.0
    %958 = vmatpush1.msra.mxu0 0.0
    %959 = vmatprep.subr.mxu0 0.0
    %960 = vmatpush1.msra.mxu0 0.0
    %961 = vmatprep.subr.mxu0 0.0
    %962 = vmatpush1.msra.mxu0 0.0
    %963 = vmatprep.subr.mxu0 0.0
    %964 = vmatpush1.msra.mxu0 0.0
    %965 = vmatprep.subr.mxu0 0.0
    %966 = vmatpush1.msra.mxu0 0.0
    %967 = vmatprep.subr.mxu0 0.0
    %968 = vmatpush1.msra.mxu0 0.0
    %969 = vmatprep.subr.mxu0 0.0
    %970 = vmatpush1.msra.mxu0 0.0
    %971 = vmatprep.subr.mxu0 0.0
    %972 = vmatpush1.msra.mxu0 0.0
    %973 = vmatprep.mubr.f32.mxu0 0.0
    %974 = vmatmul.mubr.f32.gmra.mrb[0].mxu0 %v907
    %v975 = vpop.f32.mrb[0].mxu0
    %v976 = vadd.f32 0.0, %v975
    %v977 = vpop.f32.mrb[0].mxu0
    %978 = vdwg.mxu0
    %v979 = vadd.f32 %v889, %v976
    %s980 = scalar_lea.vmem [#allocation8], 768
    %v981 = vld [vmem:[%s980] sm:$0xff]
    %v982 = vld [vmem:[%s980 + $0x8] sm:$0xff]
    %v983 = vld [vmem:[%s980 + $0x10] sm:$0xff]
    %v984 = vld [vmem:[%s980 + $0x18] sm:$0xff]
    %v985 = vld [vmem:[%s980 + $0x20] sm:$0xff]
    %v986 = vld [vmem:[%s980 + $0x28] sm:$0xff]
    %v987 = vld [vmem:[%s980 + $0x30] sm:$0xff]
    %v988 = vld [vmem:[%s980 + $0x38] sm:$0xff]
    %v989 = vld [vmem:[%s980 + $0x40] sm:$0xff]
    %v990 = vld [vmem:[%s980 + $0x48] sm:$0xff]
    %v991 = vld [vmem:[%s980 + $0x50] sm:$0xff]
    %v992 = vld [vmem:[%s980 + $0x58] sm:$0xff]
    %v993 = vld [vmem:[%s980 + $0x60] sm:$0xff]
    %v994 = vld [vmem:[%s980 + $0x68] sm:$0xff]
    %v995 = vld [vmem:[%s980 + $0x70] sm:$0xff]
    %v996 = vld [vmem:[%s980 + $0x78] sm:$0xff]
    %v997 = vrot.slane %v438, 6
    %999 = vmatprep.subr.mxu0 0.0
    %1000 = vmatpush1.msra.mxu0 %v981
    %1001 = vmatprep.subr.mxu0 0.0
    %1002 = vmatpush1.msra.mxu0 %v982
    %1003 = vmatprep.subr.mxu0 0.0
    %1004 = vmatpush1.msra.mxu0 %v983
    %1005 = vmatprep.subr.mxu0 0.0
    %1006 = vmatpush1.msra.mxu0 %v984
    %1007 = vmatprep.subr.mxu0 0.0
    %1008 = vmatpush1.msra.mxu0 %v985
    %1009 = vmatprep.subr.mxu0 0.0
    %1010 = vmatpush1.msra.mxu0 %v986
    %1011 = vmatprep.subr.mxu0 0.0
    %1012 = vmatpush1.msra.mxu0 %v987
    %1013 = vmatprep.subr.mxu0 0.0
    %1014 = vmatpush1.msra.mxu0 %v988
    %1015 = vmatprep.subr.mxu0 0.0
    %1016 = vmatpush1.msra.mxu0 %v989
    %1017 = vmatprep.subr.mxu0 0.0
    %1018 = vmatpush1.msra.mxu0 %v990
    %1019 = vmatprep.subr.mxu0 0.0
    %1020 = vmatpush1.msra.mxu0 %v991
    %1021 = vmatprep.subr.mxu0 0.0
    %1022 = vmatpush1.msra.mxu0 %v992
    %1023 = vmatprep.subr.mxu0 0.0
    %1024 = vmatpush1.msra.mxu0 %v993
    %1025 = vmatprep.subr.mxu0 0.0
    %1026 = vmatpush1.msra.mxu0 %v994
    %1027 = vmatprep.subr.mxu0 0.0
    %1028 = vmatpush1.msra.mxu0 %v995
    %1029 = vmatprep.subr.mxu0 0.0
    %1030 = vmatpush1.msra.mxu0 %v996
    %1031 = vmatprep.subr.mxu0 0.0
    %1032 = vmatpush1.msra.mxu0 0.0
    %1033 = vmatprep.subr.mxu0 0.0
    %1034 = vmatpush1.msra.mxu0 0.0
    %1035 = vmatprep.subr.mxu0 0.0
    %1036 = vmatpush1.msra.mxu0 0.0
    %1037 = vmatprep.subr.mxu0 0.0
    %1038 = vmatpush1.msra.mxu0 0.0
    %1039 = vmatprep.subr.mxu0 0.0
    %1040 = vmatpush1.msra.mxu0 0.0
    %1041 = vmatprep.subr.mxu0 0.0
    %1042 = vmatpush1.msra.mxu0 0.0
    %1043 = vmatprep.subr.mxu0 0.0
    %1044 = vmatpush1.msra.mxu0 0.0
    %1045 = vmatprep.subr.mxu0 0.0
    %1046 = vmatpush1.msra.mxu0 0.0
    %1047 = vmatprep.subr.mxu0 0.0
    %1048 = vmatpush1.msra.mxu0 0.0
    %1049 = vmatprep.subr.mxu0 0.0
    %1050 = vmatpush1.msra.mxu0 0.0
    %1051 = vmatprep.subr.mxu0 0.0
    %1052 = vmatpush1.msra.mxu0 0.0
    %1053 = vmatprep.subr.mxu0 0.0
    %1054 = vmatpush1.msra.mxu0 0.0
    %1055 = vmatprep.subr.mxu0 0.0
    %1056 = vmatpush1.msra.mxu0 0.0
    %1057 = vmatprep.subr.mxu0 0.0
    %1058 = vmatpush1.msra.mxu0 0.0
    %1059 = vmatprep.subr.mxu0 0.0
    %1060 = vmatpush1.msra.mxu0 0.0
    %1061 = vmatprep.subr.mxu0 0.0
    %1062 = vmatpush1.msra.mxu0 0.0
    %1063 = vmatprep.mubr.f32.mxu0 0.0
    %1064 = vmatmul.mubr.f32.gmra.mrb[0].mxu0 %v997
    %v1065 = vpop.f32.mrb[0].mxu0
    %v1066 = vadd.f32 0.0, %v1065
    %v1067 = vpop.f32.mrb[0].mxu0
    %1068 = vdwg.mxu0
    %v1069 = vadd.f32 %v979, %v1066
    %s1070 = scalar_lea.vmem [#allocation8], 896
    %v1071 = vld [vmem:[%s1070] sm:$0xff]
    %v1072 = vld [vmem:[%s1070 + $0x8] sm:$0xff]
    %v1073 = vld [vmem:[%s1070 + $0x10] sm:$0xff]
    %v1074 = vld [vmem:[%s1070 + $0x18] sm:$0xff]
    %v1075 = vld [vmem:[%s1070 + $0x20] sm:$0xff]
    %v1076 = vld [vmem:[%s1070 + $0x28] sm:$0xff]
    %v1077 = vld [vmem:[%s1070 + $0x30] sm:$0xff]
    %v1078 = vld [vmem:[%s1070 + $0x38] sm:$0xff]
    %v1079 = vld [vmem:[%s1070 + $0x40] sm:$0xff]
    %v1080 = vld [vmem:[%s1070 + $0x48] sm:$0xff]
    %v1081 = vld [vmem:[%s1070 + $0x50] sm:$0xff]
    %v1082 = vld [vmem:[%s1070 + $0x58] sm:$0xff]
    %v1083 = vld [vmem:[%s1070 + $0x60] sm:$0xff]
    %v1084 = vld [vmem:[%s1070 + $0x68] sm:$0xff]
    %v1085 = vld [vmem:[%s1070 + $0x70] sm:$0xff]
    %v1086 = vld [vmem:[%s1070 + $0x78] sm:$0xff]
    %v1087 = vrot.slane %v438, 7
    %1089 = vmatprep.subr.mxu0 0.0
    %1090 = vmatpush1.msra.mxu0 %v1071
    %1091 = vmatprep.subr.mxu0 0.0
    %1092 = vmatpush1.msra.mxu0 %v1072
    %1093 = vmatprep.subr.mxu0 0.0
    %1094 = vmatpush1.msra.mxu0 %v1073
    %1095 = vmatprep.subr.mxu0 0.0
    %1096 = vmatpush1.msra.mxu0 %v1074
    %1097 = vmatprep.subr.mxu0 0.0
    %1098 = vmatpush1.msra.mxu0 %v1075
    %1099 = vmatprep.subr.mxu0 0.0
    %1100 = vmatpush1.msra.mxu0 %v1076
    %1101 = vmatprep.subr.mxu0 0.0
    %1102 = vmatpush1.msra.mxu0 %v1077
    %1103 = vmatprep.subr.mxu0 0.0
    %1104 = vmatpush1.msra.mxu0 %v1078
    %1105 = vmatprep.subr.mxu0 0.0
    %1106 = vmatpush1.msra.mxu0 %v1079
    %1107 = vmatprep.subr.mxu0 0.0
    %1108 = vmatpush1.msra.mxu0 %v1080
    %1109 = vmatprep.subr.mxu0 0.0
    %1110 = vmatpush1.msra.mxu0 %v1081
    %1111 = vmatprep.subr.mxu0 0.0
    %1112 = vmatpush1.msra.mxu0 %v1082
    %1113 = vmatprep.subr.mxu0 0.0
    %1114 = vmatpush1.msra.mxu0 %v1083
    %1115 = vmatprep.subr.mxu0 0.0
    %1116 = vmatpush1.msra.mxu0 %v1084
    %1117 = vmatprep.subr.mxu0 0.0
    %1118 = vmatpush1.msra.mxu0 %v1085
    %1119 = vmatprep.subr.mxu0 0.0
    %1120 = vmatpush1.msra.mxu0 %v1086
    %1121 = vmatprep.subr.mxu0 0.0
    %1122 = vmatpush1.msra.mxu0 0.0
    %1123 = vmatprep.subr.mxu0 0.0
    %1124 = vmatpush1.msra.mxu0 0.0
    %1125 = vmatprep.subr.mxu0 0.0
    %1126 = vmatpush1.msra.mxu0 0.0
    %1127 = vmatprep.subr.mxu0 0.0
    %1128 = vmatpush1.msra.mxu0 0.0
    %1129 = vmatprep.subr.mxu0 0.0
    %1130 = vmatpush1.msra.mxu0 0.0
    %1131 = vmatprep.subr.mxu0 0.0
    %1132 = vmatpush1.msra.mxu0 0.0
    %1133 = vmatprep.subr.mxu0 0.0
    %1134 = vmatpush1.msra.mxu0 0.0
    %1135 = vmatprep.subr.mxu0 0.0
    %1136 = vmatpush1.msra.mxu0 0.0
    %1137 = vmatprep.subr.mxu0 0.0
    %1138 = vmatpush1.msra.mxu0 0.0
    %1139 = vmatprep.subr.mxu0 0.0
    %1140 = vmatpush1.msra.mxu0 0.0
    %1141 = vmatprep.subr.mxu0 0.0
    %1142 = vmatpush1.msra.mxu0 0.0
    %1143 = vmatprep.subr.mxu0 0.0
    %1144 = vmatpush1.msra.mxu0 0.0
    %1145 = vmatprep.subr.mxu0 0.0
    %1146 = vmatpush1.msra.mxu0 0.0
    %1147 = vmatprep.subr.mxu0 0.0
    %1148 = vmatpush1.msra.mxu0 0.0
    %1149 = vmatprep.subr.mxu0 0.0
    %1150 = vmatpush1.msra.mxu0 0.0
    %1151 = vmatprep.subr.mxu0 0.0
    %1152 = vmatpush1.msra.mxu0 0.0
    %1153 = vmatprep.mubr.f32.mxu0 0.0
    %1154 = vmatmul.mubr.f32.gmra.mrb[0].mxu0 %v1087
    %v1155 = vpop.f32.mrb[0].mxu0
    %v1156 = vadd.f32 0.0, %v1155
    %v1157 = vpop.f32.mrb[0].mxu0
    %1158 = vdwg.mxu0
    %v1159 = vadd.f32 %v1069, %v1156
    %s1160 = scalar_lea.vmem [#allocation8], 1024
    %v1161 = vld [vmem:[%s1160] sm:$0xff]
    %v1162 = vld [vmem:[%s1160 + $0x8] sm:$0xff]
    %v1163 = vld [vmem:[%s1160 + $0x10] sm:$0xff]
    %v1164 = vld [vmem:[%s1160 + $0x18] sm:$0xff]
    %v1165 = vld [vmem:[%s1160 + $0x20] sm:$0xff]
    %v1166 = vld [vmem:[%s1160 + $0x28] sm:$0xff]
    %v1167 = vld [vmem:[%s1160 + $0x30] sm:$0xff]
    %v1168 = vld [vmem:[%s1160 + $0x38] sm:$0xff]
    %v1169 = vld [vmem:[%s1160 + $0x40] sm:$0xff]
    %v1170 = vld [vmem:[%s1160 + $0x48] sm:$0xff]
    %v1171 = vld [vmem:[%s1160 + $0x50] sm:$0xff]
    %v1172 = vld [vmem:[%s1160 + $0x58] sm:$0xff]
    %v1173 = vld [vmem:[%s1160 + $0x60] sm:$0xff]
    %v1174 = vld [vmem:[%s1160 + $0x68] sm:$0xff]
    %v1175 = vld [vmem:[%s1160 + $0x70] sm:$0xff]
    %v1176 = vld [vmem:[%s1160 + $0x78] sm:$0xff]
    %1177 = vmatprep.subr.mxu0 0.0
    %1178 = vmatpush1.msra.mxu0 %v1161
    %1179 = vmatprep.subr.mxu0 0.0
    %1180 = vmatpush1.msra.mxu0 %v1162
    %1181 = vmatprep.subr.mxu0 0.0
    %1182 = vmatpush1.msra.mxu0 %v1163
    %1183 = vmatprep.subr.mxu0 0.0
    %1184 = vmatpush1.msra.mxu0 %v1164
    %1185 = vmatprep.subr.mxu0 0.0
    %1186 = vmatpush1.msra.mxu0 %v1165
    %1187 = vmatprep.subr.mxu0 0.0
    %1188 = vmatpush1.msra.mxu0 %v1166
    %1189 = vmatprep.subr.mxu0 0.0
    %1190 = vmatpush1.msra.mxu0 %v1167
    %1191 = vmatprep.subr.mxu0 0.0
    %1192 = vmatpush1.msra.mxu0 %v1168
    %1193 = vmatprep.subr.mxu0 0.0
    %1194 = vmatpush1.msra.mxu0 %v1169
    %1195 = vmatprep.subr.mxu0 0.0
    %1196 = vmatpush1.msra.mxu0 %v1170
    %1197 = vmatprep.subr.mxu0 0.0
    %1198 = vmatpush1.msra.mxu0 %v1171
    %1199 = vmatprep.subr.mxu0 0.0
    %1200 = vmatpush1.msra.mxu0 %v1172
    %1201 = vmatprep.subr.mxu0 0.0
    %1202 = vmatpush1.msra.mxu0 %v1173
    %1203 = vmatprep.subr.mxu0 0.0
    %1204 = vmatpush1.msra.mxu0 %v1174
    %1205 = vmatprep.subr.mxu0 0.0
    %1206 = vmatpush1.msra.mxu0 %v1175
    %1207 = vmatprep.subr.mxu0 0.0
    %1208 = vmatpush1.msra.mxu0 %v1176
    %1209 = vmatprep.subr.mxu0 0.0
    %1210 = vmatpush1.msra.mxu0 0.0
    %1211 = vmatprep.subr.mxu0 0.0
    %1212 = vmatpush1.msra.mxu0 0.0
    %1213 = vmatprep.subr.mxu0 0.0
    %1214 = vmatpush1.msra.mxu0 0.0
    %1215 = vmatprep.subr.mxu0 0.0
    %1216 = vmatpush1.msra.mxu0 0.0
    %1217 = vmatprep.subr.mxu0 0.0
    %1218 = vmatpush1.msra.mxu0 0.0
    %1219 = vmatprep.subr.mxu0 0.0
    %1220 = vmatpush1.msra.mxu0 0.0
    %1221 = vmatprep.subr.mxu0 0.0
    %1222 = vmatpush1.msra.mxu0 0.0
    %1223 = vmatprep.subr.mxu0 0.0
    %1224 = vmatpush1.msra.mxu0 0.0
    %1225 = vmatprep.subr.mxu0 0.0
    %1226 = vmatpush1.msra.mxu0 0.0
    %1227 = vmatprep.subr.mxu0 0.0
    %1228 = vmatpush1.msra.mxu0 0.0
    %1229 = vmatprep.subr.mxu0 0.0
    %1230 = vmatpush1.msra.mxu0 0.0
    %1231 = vmatprep.subr.mxu0 0.0
    %1232 = vmatpush1.msra.mxu0 0.0
    %1233 = vmatprep.subr.mxu0 0.0
    %1234 = vmatpush1.msra.mxu0 0.0
    %1235 = vmatprep.subr.mxu0 0.0
    %1236 = vmatpush1.msra.mxu0 0.0
    %1237 = vmatprep.subr.mxu0 0.0
    %1238 = vmatpush1.msra.mxu0 0.0
    %1239 = vmatprep.subr.mxu0 0.0
    %1240 = vmatpush1.msra.mxu0 0.0
    %1241 = vmatprep.mubr.f32.mxu0 0.0
    %1242 = vmatmul.mubr.f32.gmra.mrb[0].mxu0 %v441
    %v1243 = vpop.f32.mrb[0].mxu0
    %v1244 = vadd.f32 0.0, %v1243
    %v1245 = vpop.f32.mrb[0].mxu0
    %1246 = vdwg.mxu0
    %v1247 = vadd.f32 %v1159, %v1244
    %s1248 = sld [smem:[#allocation2]]
    %v1249 = vstv %s1248
    %v1250 = vadd.f32 %v1247, %v1249
    %v1251 = vxor.u32 %v1250, 2147483648
    %v1252 = vmul.f32 %v1251, 1.442695
    %v1253 = vpow.pop %v1252
    %v1254 = vadd.f32 %v1253, 1.0
    %v1255 = vrcp.pop %v1254
    %v1256 = vmul.f32 1.0, %v1255
    %v1257 = vadd.f32 %v1256, 1e-05
    %v1258 = vlaneseq
    %v1259 = vshrl.u32 %v1258, 7
    %v1260 = vsub.s32 0, %v1259
    %v1261 = vrot.slane %v1257, %v1260
    %v1262 = vmul.f32 %v145, %v1261
    %vm1263 = vcmask 1041408
    %v1264 = vsel %vm1263, %v1262, 0.0
    %1265 = vadd.xlane.f32.xlu0 %v1264
    %v1266 = vpop.xlane.xlu0 %1265
    %v1267 = vmul.f32 %v1266, 64.0
    %v1268 = vrcp.pop %v1267
    %v1269 = vmul.f32 %v1262, %v1268
    %v1270 = vpack.c.bf16 %v1269, %v1269
    %1271 = vmatprep.subr.bf16.mxu0 0
    %1272 = vmatpush1.bf16.xpose.msra.mxu0 %v298
    %1273 = vmatprep.subr.bf16.mxu0 0
    %1274 = vmatpush1.bf16.xpose.msra.mxu0 %v299
    %1275 = vmatprep.subr.bf16.mxu0 0
    %1276 = vmatpush1.bf16.xpose.msra.mxu0 %v300
    %1277 = vmatprep.subr.bf16.mxu0 0
    %1278 = vmatpush1.bf16.xpose.msra.mxu0 %v301
    %1279 = vmatprep.subr.bf16.mxu0 0
    %1280 = vmatpush1.bf16.xpose.msra.mxu0 %v302
    %1281 = vmatprep.subr.bf16.mxu0 0
    %1282 = vmatpush1.bf16.xpose.msra.mxu0 %v303
    %1283 = vmatprep.subr.bf16.mxu0 0
    %1284 = vmatpush1.bf16.xpose.msra.mxu0 %v304
    %1285 = vmatprep.subr.bf16.mxu0 0
    %1286 = vmatpush1.bf16.xpose.msra.mxu0 %v305
    %1287 = vmatprep.subr.bf16.mxu0 0
    %1288 = vmatpush1.bf16.xpose.msra.mxu0 %v306
    %1289 = vmatprep.subr.bf16.mxu0 0
    %1290 = vmatpush1.bf16.xpose.msra.mxu0 %v307
    %1291 = vmatprep.subr.bf16.mxu0 0
    %1292 = vmatpush1.bf16.xpose.msra.mxu0 %v308
    %1293 = vmatprep.subr.bf16.mxu0 0
    %1294 = vmatpush1.bf16.xpose.msra.mxu0 %v309
    %1295 = vmatprep.subr.bf16.mxu0 0
    %1296 = vmatpush1.bf16.xpose.msra.mxu0 %v310
    %1297 = vmatprep.subr.bf16.mxu0 0
    %1298 = vmatpush1.bf16.xpose.msra.mxu0 %v311
    %1299 = vmatprep.subr.bf16.mxu0 0
    %1300 = vmatpush1.bf16.xpose.msra.mxu0 %v312
    %1301 = vmatprep.subr.bf16.mxu0 0
    %1302 = vmatpush1.bf16.xpose.msra.mxu0 %v313
    %1303 = vmatprep.mubr.bf16.mxu0 0
    %1304 = vmatmul.mubr.bf16.gmra.mrb[0].mxu0 %v1270
    %v1305 = vpop.f32.mrb[0].mxu0
    %v1306 = vadd.f32 0.0, %v1305
    %v1307 = vpop.f32.mrb[0].mxu0
    %v1308 = vadd.f32 0.0, %v1307
    %v1309 = vpop.f32.mrb[0].mxu0
    %v1310 = vpop.f32.mrb[0].mxu0
    %1311 = vdwg.mxu0
    %1312 = vmatprep.subr.bf16.mxu0 0
    %1313 = vmatpush1.bf16.xpose.msra.mxu0 %v314
    %1314 = vmatprep.subr.bf16.mxu0 0
    %1315 = vmatpush1.bf16.xpose.msra.mxu0 %v315
    %1316 = vmatprep.subr.bf16.mxu0 0
    %1317 = vmatpush1.bf16.xpose.msra.mxu0 %v316
    %1318 = vmatprep.subr.bf16.mxu0 0
    %1319 = vmatpush1.bf16.xpose.msra.mxu0 %v317
    %1320 = vmatprep.subr.bf16.mxu0 0
    %1321 = vmatpush1.bf16.xpose.msra.mxu0 %v318
    %1322 = vmatprep.subr.bf16.mxu0 0
    %1323 = vmatpush1.bf16.xpose.msra.mxu0 %v319
    %1324 = vmatprep.subr.bf16.mxu0 0
    %1325 = vmatpush1.bf16.xpose.msra.mxu0 %v320
    %1326 = vmatprep.subr.bf16.mxu0 0
    %1327 = vmatpush1.bf16.xpose.msra.mxu0 %v321
    %1328 = vmatprep.subr.bf16.mxu0 0
    %1329 = vmatpush1.bf16.xpose.msra.mxu0 %v322
    %1330 = vmatprep.subr.bf16.mxu0 0
    %1331 = vmatpush1.bf16.xpose.msra.mxu0 %v323
    %1332 = vmatprep.subr.bf16.mxu0 0
    %1333 = vmatpush1.bf16.xpose.msra.mxu0 %v324
    %1334 = vmatprep.subr.bf16.mxu0 0
    %1335 = vmatpush1.bf16.xpose.msra.mxu0 %v325
    %1336 = vmatprep.subr.bf16.mxu0 0
    %1337 = vmatpush1.bf16.xpose.msra.mxu0 %v326
    %1338 = vmatprep.subr.bf16.mxu0 0
    %1339 = vmatpush1.bf16.xpose.msra.mxu0 %v327
    %1340 = vmatprep.subr.bf16.mxu0 0
    %1341 = vmatpush1.bf16.xpose.msra.mxu0 %v328
    %1342 = vmatprep.subr.bf16.mxu0 0
    %1343 = vmatpush1.bf16.xpose.msra.mxu0 %v329
    %1344 = vmatprep.mubr.bf16.mxu0 0
    %1345 = vmatmul.mubr.bf16.gmra.mrb[0].mxu0 %v1270
    %v1346 = vpop.f32.mrb[0].mxu0
    %v1347 = vadd.f32 0.0, %v1346
    %v1348 = vpop.f32.mrb[0].mxu0
    %v1349 = vadd.f32 0.0, %v1348
    %v1350 = vpop.f32.mrb[0].mxu0
    %v1351 = vpop.f32.mrb[0].mxu0
    %1352 = vdwg.mxu0
    %v1353 = vmul.f32 %v1306, %v1306
    %v1354 = vmul.f32 %v1308, %v1308
    %v1355 = vmul.f32 %v1347, %v1347
    %v1356 = vmul.f32 %v1349, %v1349
    %v1357 = vsel %vm1263, %v1353, 0.0
    %v1358 = vsel %vm1263, %v1354, 0.0
    %v1359 = vadd.f32 %v1357, %v1358
    %v1360 = vsel %vm1263, %v1355, 0.0
    %v1361 = vadd.f32 %v1359, %v1360
    %v1362 = vsel %vm1263, %v1356, 0.0
    %v1363 = vadd.f32 %v1361, %v1362
    %1364 = vadd.xlane.f32.xlu0 %v1363
    %v1365 = vpop.xlane.xlu0 %1364
    %v1366 = vmax.f32 %v1365, 1e-24
    %v1367 = vrsqrt.pop %v1366
    %v1368 = vmul.f32 %v1306, %v1367
    %v1369 = vmul.f32 %v1308, %v1367
    %v1370 = vmul.f32 %v1347, %v1367
    %v1371 = vmul.f32 %v1349, %v1367
    %v1372 = vpack.c.bf16 %v1368, %v1368
    %v1373 = vpack.c.bf16 %v1369, %v1369
    %v1374 = vpack.c.bf16 %v1370, %v1370
    %v1375 = vpack.c.bf16 %v1371, %v1371
    %v1376 = vld [vmem:[#allocation9] sm:$0xff]
    %v1377 = vld [vmem:[#allocation9 + $0x8] sm:$0xff]
    %v1378 = vld [vmem:[#allocation9 + $0x10] sm:$0xff]
    %v1379 = vld [vmem:[#allocation9 + $0x18] sm:$0xff]
    %v1380 = vld [vmem:[#allocation9 + $0x20] sm:$0xff]
    %v1381 = vld [vmem:[#allocation9 + $0x28] sm:$0xff]
    %v1382 = vld [vmem:[#allocation9 + $0x30] sm:$0xff]
    %v1383 = vld [vmem:[#allocation9 + $0x38] sm:$0xff]
    %v1384 = vld [vmem:[#allocation9 + $0x40] sm:$0xff]
    %v1385 = vld [vmem:[#allocation9 + $0x48] sm:$0xff]
    %v1386 = vld [vmem:[#allocation9 + $0x50] sm:$0xff]
    %v1387 = vld [vmem:[#allocation9 + $0x58] sm:$0xff]
    %v1388 = vld [vmem:[#allocation9 + $0x60] sm:$0xff]
    %v1389 = vld [vmem:[#allocation9 + $0x68] sm:$0xff]
    %v1390 = vld [vmem:[#allocation9 + $0x70] sm:$0xff]
    %v1391 = vld [vmem:[#allocation9 + $0x78] sm:$0xff]
    %v1392 = vld [vmem:[#allocation9 + $0x80] sm:$0xff]
    %v1393 = vld [vmem:[#allocation9 + $0x88] sm:$0xff]
    %v1394 = vld [vmem:[#allocation9 + $0x90] sm:$0xff]
    %v1395 = vld [vmem:[#allocation9 + $0x98] sm:$0xff]
    %v1396 = vld [vmem:[#allocation9 + $0xa0] sm:$0xff]
    %v1397 = vld [vmem:[#allocation9 + $0xa8] sm:$0xff]
    %v1398 = vld [vmem:[#allocation9 + $0xb0] sm:$0xff]
    %v1399 = vld [vmem:[#allocation9 + $0xb8] sm:$0xff]
    %v1400 = vld [vmem:[#allocation9 + $0xc0] sm:$0xff]
    %v1401 = vld [vmem:[#allocation9 + $0xc8] sm:$0xff]
    %v1402 = vld [vmem:[#allocation9 + $0xd0] sm:$0xff]
    %v1403 = vld [vmem:[#allocation9 + $0xd8] sm:$0xff]
    %v1404 = vld [vmem:[#allocation9 + $0xe0] sm:$0xff]
    %v1405 = vld [vmem:[#allocation9 + $0xe8] sm:$0xff]
    %v1406 = vld [vmem:[#allocation9 + $0xf0] sm:$0xff]
    %v1407 = vld [vmem:[#allocation9 + $0xf8] sm:$0xff]
    %v1440 = vunpack.c.l.b16 %v1376
    %v1441 = vunpack.c.h.b16 %v1376
    %v1442 = vunpack.c.l.b16 %v1377
    %v1443 = vunpack.c.h.b16 %v1377
    %v1444 = vunpack.c.l.b16 %v1378
    %v1445 = vunpack.c.h.b16 %v1378
    %v1446 = vunpack.c.l.b16 %v1379
    %v1447 = vunpack.c.h.b16 %v1379
    %v1448 = vunpack.c.l.b16 %v1380
    %v1449 = vunpack.c.h.b16 %v1380
    %v1450 = vunpack.c.l.b16 %v1381
    %v1451 = vunpack.c.h.b16 %v1381
    %v1452 = vunpack.c.l.b16 %v1382
    %v1453 = vunpack.c.h.b16 %v1382
    %v1454 = vunpack.c.l.b16 %v1383
    %v1455 = vunpack.c.h.b16 %v1383
    %v1456 = vunpack.c.l.b16 %v1384
    %v1457 = vunpack.c.h.b16 %v1384
    %v1458 = vunpack.c.l.b16 %v1385
    %v1459 = vunpack.c.h.b16 %v1385
    %v1460 = vunpack.c.l.b16 %v1386
    %v1461 = vunpack.c.h.b16 %v1386
    %v1462 = vunpack.c.l.b16 %v1387
    %v1463 = vunpack.c.h.b16 %v1387
    %v1464 = vunpack.c.l.b16 %v1388
    %v1465 = vunpack.c.h.b16 %v1388
    %v1466 = vunpack.c.l.b16 %v1389
    %v1467 = vunpack.c.h.b16 %v1389
    %v1468 = vunpack.c.l.b16 %v1390
    %v1469 = vunpack.c.h.b16 %v1390
    %v1470 = vunpack.c.l.b16 %v1391
    %v1471 = vunpack.c.h.b16 %v1391
    %v1472 = vunpack.c.l.b16 %v1392
    %v1473 = vunpack.c.h.b16 %v1392
    %v1474 = vunpack.c.l.b16 %v1393
    %v1475 = vunpack.c.h.b16 %v1393
    %v1476 = vunpack.c.l.b16 %v1394
    %v1477 = vunpack.c.h.b16 %v1394
    %v1478 = vunpack.c.l.b16 %v1395
    %v1479 = vunpack.c.h.b16 %v1395
    %v1480 = vunpack.c.l.b16 %v1396
    %v1481 = vunpack.c.h.b16 %v1396
    %v1482 = vunpack.c.l.b16 %v1397
    %v1483 = vunpack.c.h.b16 %v1397
    %v1484 = vunpack.c.l.b16 %v1398
    %v1485 = vunpack.c.h.b16 %v1398
    %v1486 = vunpack.c.l.b16 %v1399
    %v1487 = vunpack.c.h.b16 %v1399
    %v1488 = vunpack.c.l.b16 %v1400
    %v1489 = vunpack.c.h.b16 %v1400
    %v1490 = vunpack.c.l.b16 %v1401
    %v1491 = vunpack.c.h.b16 %v1401
    %v1492 = vunpack.c.l.b16 %v1402
    %v1493 = vunpack.c.h.b16 %v1402
    %v1494 = vunpack.c.l.b16 %v1403
    %v1495 = vunpack.c.h.b16 %v1403
    %v1496 = vunpack.c.l.b16 %v1404
    %v1497 = vunpack.c.h.b16 %v1404
    %v1498 = vunpack.c.l.b16 %v1405
    %v1499 = vunpack.c.h.b16 %v1405
    %v1500 = vunpack.c.l.b16 %v1406
    %v1501 = vunpack.c.h.b16 %v1406
    %v1502 = vunpack.c.l.b16 %v1407
    %v1503 = vunpack.c.h.b16 %v1407
    %v1504 = vpack.c.b16 %v1444, %v1440
    %v1505 = vpack.c.b16 %v1445, %v1441
    %v1506 = vpack.c.b16 %v1446, %v1442
    %v1507 = vpack.c.b16 %v1447, %v1443
    %v1508 = vpack.c.b16 %v1452, %v1448
    %v1509 = vpack.c.b16 %v1453, %v1449
    %v1510 = vpack.c.b16 %v1454, %v1450
    %v1511 = vpack.c.b16 %v1455, %v1451
    %v1512 = vpack.c.b16 %v1460, %v1456
    %v1513 = vpack.c.b16 %v1461, %v1457
    %v1514 = vpack.c.b16 %v1462, %v1458
    %v1515 = vpack.c.b16 %v1463, %v1459
    %v1516 = vpack.c.b16 %v1468, %v1464
    %v1517 = vpack.c.b16 %v1469, %v1465
    %v1518 = vpack.c.b16 %v1470, %v1466
    %v1519 = vpack.c.b16 %v1471, %v1467
    %v1520 = vpack.c.b16 %v1476, %v1472
    %v1521 = vpack.c.b16 %v1477, %v1473
    %v1522 = vpack.c.b16 %v1478, %v1474
    %v1523 = vpack.c.b16 %v1479, %v1475
    %v1524 = vpack.c.b16 %v1484, %v1480
    %v1525 = vpack.c.b16 %v1485, %v1481
    %v1526 = vpack.c.b16 %v1486, %v1482
    %v1527 = vpack.c.b16 %v1487, %v1483
    %v1528 = vpack.c.b16 %v1492, %v1488
    %v1529 = vpack.c.b16 %v1493, %v1489
    %v1530 = vpack.c.b16 %v1494, %v1490
    %v1531 = vpack.c.b16 %v1495, %v1491
    %v1532 = vpack.c.b16 %v1500, %v1496
    %v1533 = vpack.c.b16 %v1501, %v1497
    %v1534 = vpack.c.b16 %v1502, %v1498
    %v1535 = vpack.c.b16 %v1503, %v1499
    %1568 = vmatprep.subr.bf16.mxu0 %v1505
    %1569 = vmatpush1.bf16.xpose.msra.mxu0 %v1504
    %1570 = vmatprep.subr.bf16.mxu0 %v1509
    %1571 = vmatpush1.bf16.xpose.msra.mxu0 %v1508
    %1572 = vmatprep.subr.bf16.mxu0 %v1513
    %1573 = vmatpush1.bf16.xpose.msra.mxu0 %v1512
    %1574 = vmatprep.subr.bf16.mxu0 %v1517
    %1575 = vmatpush1.bf16.xpose.msra.mxu0 %v1516
    %1576 = vmatprep.subr.bf16.mxu0 %v1521
    %1577 = vmatpush1.bf16.xpose.msra.mxu0 %v1520
    %1578 = vmatprep.subr.bf16.mxu0 %v1525
    %1579 = vmatpush1.bf16.xpose.msra.mxu0 %v1524
    %1580 = vmatprep.subr.bf16.mxu0 %v1529
    %1581 = vmatpush1.bf16.xpose.msra.mxu0 %v1528
    %1582 = vmatprep.subr.bf16.mxu0 %v1533
    %1583 = vmatpush1.bf16.xpose.msra.mxu0 %v1532
    %1584 = vmatprep.subr.bf16.mxu0 0
    %1585 = vmatpush1.bf16.xpose.msra.mxu0 0
    %1586 = vmatprep.subr.bf16.mxu0 0
    %1587 = vmatpush1.bf16.xpose.msra.mxu0 0
    %1588 = vmatprep.subr.bf16.mxu0 0
    %1589 = vmatpush1.bf16.xpose.msra.mxu0 0
    %1590 = vmatprep.subr.bf16.mxu0 0
    %1591 = vmatpush1.bf16.xpose.msra.mxu0 0
    %1592 = vmatprep.subr.bf16.mxu0 0
    %1593 = vmatpush1.bf16.xpose.msra.mxu0 0
    %1594 = vmatprep.subr.bf16.mxu0 0
    %1595 = vmatpush1.bf16.xpose.msra.mxu0 0
    %1596 = vmatprep.subr.bf16.mxu0 0
    %1597 = vmatpush1.bf16.xpose.msra.mxu0 0
    %1598 = vmatprep.subr.bf16.mxu0 0
    %1599 = vmatpush1.bf16.xpose.msra.mxu0 0
    %1600 = vmatprep.mubr.bf16.mxu0 %v1373
    %1601 = vmatmul.mubr.bf16.gmra.mrb[0].mxu0 %v1372
    %v1602 = vpop.f32.mrb[0].mxu0
    %v1603 = vadd.f32 0.0, %v1602
    %v1604 = vpop.f32.mrb[0].mxu0
    %v1605 = vpop.f32.mrb[0].mxu0
    %v1606 = vpop.f32.mrb[0].mxu0
    %1607 = vdwg.mxu0
    %1608 = vmatprep.subr.bf16.mxu0 %v1507
    %1609 = vmatpush1.bf16.xpose.msra.mxu0 %v1506
    %1610 = vmatprep.subr.bf16.mxu0 %v1511
    %1611 = vmatpush1.bf16.xpose.msra.mxu0 %v1510
    %1612 = vmatprep.subr.bf16.mxu0 %v1515
    %1613 = vmatpush1.bf16.xpose.msra.mxu0 %v1514
    %1614 = vmatprep.subr.bf16.mxu0 %v1519
    %1615 = vmatpush1.bf16.xpose.msra.mxu0 %v1518
    %1616 = vmatprep.subr.bf16.mxu0 %v1523
    %1617 = vmatpush1.bf16.xpose.msra.mxu0 %v1522
    %1618 = vmatprep.subr.bf16.mxu0 %v1527
    %1619 = vmatpush1.bf16.xpose.msra.mxu0 %v1526
    %1620 = vmatprep.subr.bf16.mxu0 %v1531
    %1621 = vmatpush1.bf16.xpose.msra.mxu0 %v1530
    %1622 = vmatprep.subr.bf16.mxu0 %v1535
    %1623 = vmatpush1.bf16.xpose.msra.mxu0 %v1534
    %1624 = vmatprep.subr.bf16.mxu0 0
    %1625 = vmatpush1.bf16.xpose.msra.mxu0 0
    %1626 = vmatprep.subr.bf16.mxu0 0
    %1627 = vmatpush1.bf16.xpose.msra.mxu0 0
    %1628 = vmatprep.subr.bf16.mxu0 0
    %1629 = vmatpush1.bf16.xpose.msra.mxu0 0
    %1630 = vmatprep.subr.bf16.mxu0 0
    %1631 = vmatpush1.bf16.xpose.msra.mxu0 0
    %1632 = vmatprep.subr.bf16.mxu0 0
    %1633 = vmatpush1.bf16.xpose.msra.mxu0 0
    %1634 = vmatprep.subr.bf16.mxu0 0
    %1635 = vmatpush1.bf16.xpose.msra.mxu0 0
    %1636 = vmatprep.subr.bf16.mxu0 0
    %1637 = vmatpush1.bf16.xpose.msra.mxu0 0
    %1638 = vmatprep.subr.bf16.mxu0 0
    %1639 = vmatpush1.bf16.xpose.msra.mxu0 0
    %1640 = vmatprep.mubr.bf16.mxu0 %v1375
    %1641 = vmatmul.mubr.bf16.gmra.mrb[0].mxu0 %v1374
    %v1642 = vpop.f32.mrb[0].mxu0
    %v1643 = vadd.f32 %v1603, %v1642
    %v1644 = vpop.f32.mrb[0].mxu0
    %v1645 = vpop.f32.mrb[0].mxu0
    %v1646 = vpop.f32.mrb[0].mxu0
    %1647 = vdwg.mxu0
    %v1648 = vmul.f32 %v1643, 16.0
    %1649 = vst [vmem:[#allocation11] sm:$0x3] %v1648
    // Predicated region
    $region42: #{tpu_custom_call.1} parent=1 // pred_check
      _
    $region43: #{tpu_custom_call.1} parent=1 // pred_check_branch
      %1651 = sbr.rel (0) target = $region45
    $region44: #{tpu_custom_call.1} parent=1 // pred_region
      %s1653 = ssub.s32 32, 32
      %1654 = vsyncadd [#allocation5], %s1653
      %s1656 = sshll.u32 [#allocation11], 4
      %s1657 = int_to_ptr.vmem [resolvable:$true] %s1656
      %1659 = dma.vmem_to_hbm [thread:$0]  %s1657, 32, %s6, [#allocation5]
    $region45: #{tpu_custom_call.1} parent=1 // pred_fallthru
      _
    // Predicated region
    $region46: #{tpu_custom_call.1} parent=1 // pred_check
      _
    $region47: #{tpu_custom_call.1} parent=1 // pred_check_branch
      %1661 = sbr.rel (0) target = $region49
    $region48: #{tpu_custom_call.1} parent=1 // pred_region
      %1662 = dma.done [#allocation5], 32
    $region49: #{tpu_custom_call.1} parent=1 // pred_fallthru
      _
    %1663 = vsyncpa [#allocation4], 1
    %1664 = vsyncpa [#allocation7], 1
    %1665 = vsyncpa [#allocation10], 1
    %1666 = vsyncpa [#allocation5], 1

</llo_original>
